<compile_context>
chip_gen: v7x
topology: tpu7x:2x2x1
jax: 0.10.0
libtpu: 0.0.40
codegen_flags: <defaults>
</compile_context>

<pallas_src>
import functools
import math

import jax
import jax.numpy as jnp
from jax.experimental import pallas as pl
from jax.experimental.pallas import tpu as pltpu

R_HYPER = 10.0


def _net_kernel(x_ref, w_ref, b_ref, act_ref, pooled_ref, m_sc, l_sc, *,
                total_loc):
    # x_ref:      [1, Cin, HW_t]   feature tile (f32 or bf16, channels-first)
    # w_ref:      [Co_t, Cin]      bf16 1x1-conv weight tile
    # b_ref:      [Co_t, 1]        f32 conv bias (column)
    # act_ref:    [1, Co_t, HW_t]  bf16 activation tile (pre-pooling conv output)
    # pooled_ref: [1, Co_t, 1]     f32 LSE-pooled channels (written on last HW tile)
    # m_sc, l_sc: [Co_t, 1]        f32 running max / running sum-exp scratch
    hw = pl.program_id(2)

    @pl.when(hw == 0)
    def _():
        m_sc[...] = jnp.full(m_sc.shape, -jnp.inf, dtype=m_sc.dtype)
        l_sc[...] = jnp.zeros(l_sc.shape, dtype=l_sc.dtype)

    # --- 1x1 conv slab on the MXU: [Co_t, Cin] @ [Cin, HW_t], f32 accumulate ---
    # The cast is a no-op if the wrapper already pre-cast x to bf16; otherwise
    # it is cheap VPU work on VMEM-resident data (no separate HBM cast pass).
    xt = x_ref[0].astype(jnp.bfloat16)
    a = jnp.dot(w_ref[...], xt,
                preferred_element_type=jnp.float32) + b_ref[...]   # [Co_t, HW_t] f32
    act_ref[0] = a.astype(act_ref.dtype)

    # --- online LSE pooling over spatial locations (per output channel) ---
    m_prev = m_sc[...]                                             # [Co_t, 1]
    m_new = jnp.maximum(m_prev, jnp.max(a, axis=-1, keepdims=True))
    l_sc[...] = (l_sc[...] * jnp.exp(R_HYPER * (m_prev - m_new))
                 + jnp.sum(jnp.exp(R_HYPER * (a - m_new)), axis=-1, keepdims=True))
    m_sc[...] = m_new

    @pl.when(hw == pl.num_programs(2) - 1)
    def _():
        # pooled_c = max_c + (1/r) * (log(sum_exp_c) - log(total_loc))
        pooled = m_sc[...] + (1.0 / R_HYPER) * (
            jnp.log(l_sc[...]) - math.log(float(total_loc)))
        pooled_ref[0] = pooled.astype(pooled_ref.dtype)


def _default_tiles(B, C, HW):
    """Device-aware tile defaults (see perf-review rationale in header)."""
    try:
        kind = jax.devices()[0].device_kind.lower()
    except Exception:  # pragma: no cover - defensive, never expected on TPU
        kind = ""
    if "v5" in kind:
        co_t = min(C, 512)       # v5e: compute-bound, keep working set < 16 MiB
    elif "v7" in kind and B < 2:
        co_t = min(C, 1024)      # v7x @ B==1: keep >=2 parallel units for 2 TCs
    else:
        co_t = min(C, 2048)      # v6e (and B>=2): weight resident, x read once/batch
    hw_t = min(HW, 512)
    return hw_t, co_t


def net_forward(feat_nchw, conv_w, conv_b, lin_w, lin_b, *,
                hw_tile=None, cout_tile=None, act_dtype=jnp.bfloat16):
    """feat_nchw: [B, C, H, W] backbone output.

    Returns (logits [B, O], activation [B, C, H, W], lin_w [O, C]) matching
    the PyTorch module's return tuple.  Conv matmul runs with bf16 inputs and
    f32 accumulation; LSE pooling and the linear head are f32; the activation
    feature map is returned in `act_dtype` (bf16 by default to halve its HBM
    writeback -- precision is already bounded by the bf16 MXU inputs).
    """
    B, C, H, W = feat_nchw.shape
    HW = H * W
    O = lin_w.shape[0]

    d_hw, d_co = _default_tiles(B, C, HW)
    hw_t = min(hw_tile, HW) if hw_tile is not None else d_hw
    co_t = min(cout_tile, C) if cout_tile is not None else d_co
    assert HW % hw_t == 0, "HW must be divisible by hw_tile"
    assert C % co_t == 0, "C must be divisible by cout_tile"
    assert hw_t == HW or hw_t % 128 == 0, "hw_tile must be a multiple of 128"
    assert co_t == C or co_t % 16 == 0, "cout_tile must be a multiple of 16"

    n_co = C // co_t

    # Channels-first, spatial flattened: pure reshapes, no HBM transpose pass.
    # Only pre-cast the feature map to bf16 when it will be re-read many times
    # (small cout_tile); otherwise feed f32 and cast per-tile inside the kernel,
    # which removes the standalone XLA cast pass entirely.
    x = feat_nchw.reshape(B, C, HW)
    if x.dtype != jnp.bfloat16 and n_co >= 3:
        x = x.astype(jnp.bfloat16)
    x_item = jnp.dtype(x.dtype).itemsize

    # Weights: callers should cache/pre-cast to bf16 outside the hot path; only
    # cast here if they did not.
    w = conv_w.reshape(C, C)
    if w.dtype != jnp.bfloat16:
        w = w.astype(jnp.bfloat16)
    b_col = conv_b.reshape(C, 1).astype(jnp.float32)

    act_item = jnp.dtype(act_dtype).itemsize

    # Double-buffered per-step working set; only override the scoped VMEM limit
    # when it would exceed the conservative defaults.
    vmem_need = (2 * C * hw_t * x_item          # feature tile buffers
                 + 2 * co_t * C * 2             # weight tile buffers (bf16)
                 + 2 * co_t * hw_t * act_item   # activation output buffers
                 + 2 * co_t * 4                 # pooled output buffers
                 + 2 * co_t * 4                 # bias buffers
                 + 2 * co_t * 4)                # LSE scratch
    vmem_limit = None
    if vmem_need > (24 << 20):
        vmem_limit = min(int(vmem_need * 1.25) + (8 << 20), 100 << 20)

    cost = pl.CostEstimate(
        flops=2 * B * C * C * HW,
        transcendentals=B * C * HW,
        bytes_accessed=(B * n_co * C * HW * x_item    # feature reads (re-read per Cout tile)
                        + C * C * 2                   # weight read (once, Cout outermost)
                        + B * C * HW * act_item       # activation writeback
                        + B * C * 4),                 # pooled writeback
    )

    kernel = functools.partial(_net_kernel, total_loc=HW)

    # Grid: (Cout_tiles, B, HW_tiles).  Cout outermost keeps the weight block
    # index constant across the batch axis (weights DMA'd once); HW stays the
    # innermost "arbitrary" axis so the online-LSE scratch pattern is valid.
    act, pooled = pl.pallas_call(
        kernel,
        out_shape=(
            jax.ShapeDtypeStruct((B, C, HW), act_dtype),        # activation
            jax.ShapeDtypeStruct((B, C, 1), jnp.float32),       # LSE-pooled channels
        ),
        grid_spec=pltpu.PrefetchScalarGridSpec(
            num_scalar_prefetch=0,
            grid=(n_co, B, HW // hw_t),
            in_specs=[
                pl.BlockSpec((1, C, hw_t), lambda co, b, hw: (b, 0, hw)),   # x tile
                pl.BlockSpec((co_t, C), lambda co, b, hw: (co, 0)),         # weight tile
                pl.BlockSpec((co_t, 1), lambda co, b, hw: (co, 0)),         # bias tile
            ],
            out_specs=[
                pl.BlockSpec((1, co_t, hw_t), lambda co, b, hw: (b, co, hw)),
                pl.BlockSpec((1, co_t, 1), lambda co, b, hw: (b, co, 0)),
            ],
            scratch_shapes=[
                pltpu.VMEM((co_t, 1), jnp.float32),   # running max
                pltpu.VMEM((co_t, 1), jnp.float32),   # running sum-exp
            ],
        ),
        compiler_params=pltpu.CompilerParams(
            dimension_semantics=("parallel", "parallel", "arbitrary"),
            vmem_limit_bytes=vmem_limit),
        cost_estimate=cost,
    )(x, w, b_col)

    activation = act.reshape(B, C, H, W)                 # already NCHW
    pooled2d = pooled.reshape(B, C)
    # Tiny O=8 head in plain JAX (lane-dense pooled input, f32).
    logits = pooled2d @ jnp.transpose(lin_w) + lin_b
    return logits, activation, lin_w


def _reference(feat_nchw, conv_w, conv_b, lin_w, lin_b):
    """Pure-JAX reference mirroring the PyTorch forward (with the same
    bf16-input / f32-accumulate matmul precision policy used by the kernel)."""
    B, C, H, W = feat_nchw.shape
    wc = conv_w.reshape(C, C).astype(jnp.bfloat16)
    xb = feat_nchw.astype(jnp.bfloat16)
    a = jnp.einsum('bchw,oc->bohw', xb, wc,
                   preferred_element_type=jnp.float32) + conv_b[None, :, None, None]
    m = jnp.max(a, axis=(2, 3))                                     # [B, C]
    se = jnp.sum(jnp.exp(R_HYPER * (a - m[:, :, None, None])), axis=(2, 3))
    pooled = m + (1.0 / R_HYPER) * jnp.log(se / float(H * W))
    logits = pooled @ lin_w.T + lin_b
    return logits, a


if __name__ == "__main__":
    # Small-shape stand-ins for the real sizes (C=2048 -> 256, spatial 32 -> 16).
    B, C, H, W, O = 2, 256, 16, 16, 8

    key = jax.random.PRNGKey(0)
    k_feat, k_cw, k_cb, k_lw, k_lb = jax.random.split(key, 5)

    feat = jax.random.normal(k_feat, (B, C, H, W), dtype=jnp.float32)
    conv_w = jax.random.normal(k_cw, (C, C, 1, 1), dtype=jnp.float32) * 0.02
    conv_b = jax.random.normal(k_cb, (C,), dtype=jnp.float32) * 0.02
    lin_w = jax.random.normal(k_lw, (O, C), dtype=jnp.float32) * 0.02
    lin_b = jax.random.normal(k_lb, (O,), dtype=jnp.float32) * 0.02

    # Pre-cast / cache the constant conv weight outside the hot path.
    conv_w_bf16 = conv_w.reshape(C, C).astype(jnp.bfloat16)

    ref_logits, ref_act = _reference(feat, conv_w, conv_b, lin_w, lin_b)

    # 1) Explicit small tiles: exercises multiple Cout tiles, multiple HW tiles
    #    (online-LSE accumulation) and the in-kernel f32->bf16 feature cast.
    logits, activation, ret_w = net_forward(
        feat, conv_w_bf16, conv_b, lin_w, lin_b, hw_tile=128, cout_tile=128)
    jax.block_until_ready((logits, activation, ret_w))

    assert logits.shape == (B, O)
    assert activation.shape == (B, C, H, W)
    assert ret_w.shape == (O, C)
    assert jnp.allclose(activation.astype(jnp.float32), ref_act, atol=1e-2, rtol=1e-2)
    assert jnp.allclose(logits, ref_logits, atol=2e-3, rtol=2e-3)

    # 2) Device-aware default tiles (single weight-resident Cout tile at this C).
    logits2, activation2, _ = net_forward(feat, conv_w_bf16, conv_b, lin_w, lin_b)
    jax.block_until_ready((logits2, activation2))
    assert jnp.allclose(activation2.astype(jnp.float32), ref_act, atol=1e-2, rtol=1e-2)
    assert jnp.allclose(logits2, ref_logits, atol=2e-3, rtol=2e-3)

    print("KERNEL_OK")
</pallas_src>

<mosaic_0001>
module attributes {stable_mosaic.version = 11 : i64} {
  func.func @_net_kernel(%arg0: i32, %arg1: i32, %arg2: i32, %arg3: memref<1x256x128xf32, #tpu.memory_space<vmem>>, %arg4: memref<128x256xbf16, #tpu.memory_space<vmem>>, %arg5: memref<128x1xf32, #tpu.memory_space<vmem>>, %arg6: memref<1x128x128xbf16, #tpu.memory_space<vmem>>, %arg7: memref<1x128x1xf32, #tpu.memory_space<vmem>>, %arg8: memref<128x1xf32, #tpu.memory_space<vmem>>, %arg9: memref<128x1xf32, #tpu.memory_space<vmem>>) attributes {dimension_semantics = [#tpu.dimension_semantics<parallel>, #tpu.dimension_semantics<parallel>, #tpu.dimension_semantics<arbitrary>], iteration_bounds = array<i64: 2, 2, 2>, scalar_prefetch = 0 : i64, scratch_operands = 2 : i64, tpu.core_type = #tpu.core_type<tc>, window_params = [{transform_indices = @transform_0, window_bounds = array<i64: 1, 256, 128>}, {transform_indices = @transform_1, window_bounds = array<i64: 128, 256>}, {transform_indices = @transform_2, window_bounds = array<i64: 128, 1>}, {transform_indices = @transform_3, window_bounds = array<i64: 1, 128, 128>}, {transform_indices = @transform_4, window_bounds = array<i64: 1, 128, 1>}]} {
    %c0_i32 = arith.constant 0 : i32
    %0 = arith.cmpi eq, %arg2, %c0_i32 : i32
    %1 = arith.extui %0 : i1 to i32
    %c0_i32_0 = arith.constant 0 : i32
    %2 = arith.cmpi ne, %1, %c0_i32_0 : i32
    scf.if %2 {
      %cst_23 = arith.constant 0xFF800000 : f32
      %38 = vector.broadcast %cst_23 : f32 to vector<128x1xf32>
      %c0_24 = arith.constant 0 : index
      %c0_25 = arith.constant 0 : index
      %39 = vector.load %arg8[%c0_24, %c0_25] : memref<128x1xf32, #tpu.memory_space<vmem>>, vector<128x1xf32>
      tpu.vector_store %arg8[%c0_24, %c0_25], %38 {strides = array<i32>} : memref<128x1xf32, #tpu.memory_space<vmem>>, vector<128x1xf32>,
      %cst_26 = arith.constant 0.000000e+00 : f32
      %40 = vector.broadcast %cst_26 : f32 to vector<128x1xf32>
      %c0_27 = arith.constant 0 : index
      %c0_28 = arith.constant 0 : index
      %41 = vector.load %arg9[%c0_27, %c0_28] : memref<128x1xf32, #tpu.memory_space<vmem>>, vector<128x1xf32>
      tpu.vector_store %arg9[%c0_27, %c0_28], %40 {strides = array<i32>} : memref<128x1xf32, #tpu.memory_space<vmem>>, vector<128x1xf32>,
    } else {
    }
    %c0 = arith.constant 0 : index
    %c0_1 = arith.constant 0 : index
    %c0_2 = arith.constant 0 : index
    %3 = vector.load %arg3[%c0, %c0_1, %c0_2] : memref<1x256x128xf32, #tpu.memory_space<vmem>>, vector<1x256x128xf32>
    %4 = vector.shape_cast %3 : vector<1x256x128xf32> to vector<256x128xf32>
    %5 = arith.truncf %4 : vector<256x128xf32> to vector<256x128xbf16>
    %c0_3 = arith.constant 0 : index
    %c0_4 = arith.constant 0 : index
    %6 = vector.load %arg4[%c0_3, %c0_4] : memref<128x256xbf16, #tpu.memory_space<vmem>>, vector<128x256xbf16>
    %cst = arith.constant dense<0.000000e+00> : vector<128x128xf32>
    %7 = tpu.matmul %6, %5, %cst {dimension_numbers = #tpu.dot_dimension_numbers<[1], [0], [0], [1], [0, 0, 1, 1], [], []>} : vector<128x256xbf16>, vector<256x128xbf16>, vector<128x128xf32> -> vector<128x128xf32>
    %c0_5 = arith.constant 0 : index
    %c0_6 = arith.constant 0 : index
    %8 = vector.load %arg5[%c0_5, %c0_6] : memref<128x1xf32, #tpu.memory_space<vmem>>, vector<128x1xf32>
    %9 = vector.broadcast %8 : vector<128x1xf32> to vector<128x128xf32>
    %10 = arith.addf %7, %9 : vector<128x128xf32>
    %11 = arith.truncf %10 : vector<128x128xf32> to vector<128x128xbf16>
    %c0_7 = arith.constant 0 : index
    %c0_8 = arith.constant 0 : index
    %c0_9 = arith.constant 0 : index
    %12 = vector.load %arg6[%c0_7, %c0_8, %c0_9] : memref<1x128x128xbf16, #tpu.memory_space<vmem>>, vector<1x128x128xbf16>
    %13 = vector.shape_cast %12 : vector<1x128x128xbf16> to vector<128x128xbf16>
    %14 = vector.shape_cast %11 : vector<128x128xbf16> to vector<1x128x128xbf16>
    tpu.vector_store %arg6[%c0_7, %c0_8, %c0_9], %14 {strides = array<i32>} : memref<1x128x128xbf16, #tpu.memory_space<vmem>>, vector<1x128x128xbf16>,
    %c0_10 = arith.constant 0 : index
    %c0_11 = arith.constant 0 : index
    %15 = vector.load %arg8[%c0_10, %c0_11] : memref<128x1xf32, #tpu.memory_space<vmem>>, vector<128x1xf32>
    %cst_12 = arith.constant dense<0xFF800000> : vector<128xf32>
    %16 = vector.multi_reduction <maximumf>, %10, %cst_12 [1] : vector<128x128xf32> to vector<128xf32>
    %17 = vector.shape_cast %16 : vector<128xf32> to vector<128x1xf32>
    %18 = arith.maximumf %15, %17 : vector<128x1xf32>
    %c0_13 = arith.constant 0 : index
    %c0_14 = arith.constant 0 : index
    %19 = vector.load %arg9[%c0_13, %c0_14] : memref<128x1xf32, #tpu.memory_space<vmem>>, vector<128x1xf32>
    %20 = arith.subf %15, %18 : vector<128x1xf32>
    %cst_15 = arith.constant 1.000000e+01 : f32
    %21 = vector.broadcast %cst_15 : f32 to vector<128x1xf32>
    %22 = arith.mulf %21, %20 : vector<128x1xf32>
    %23 = math.exp %22 : vector<128x1xf32>
    %24 = arith.mulf %19, %23 : vector<128x1xf32>
    %25 = vector.broadcast %18 : vector<128x1xf32> to vector<128x128xf32>
    %26 = arith.subf %10, %25 : vector<128x128xf32>
    %cst_16 = arith.constant 1.000000e+01 : f32
    %27 = vector.broadcast %cst_16 : f32 to vector<128x128xf32>
    %28 = arith.mulf %27, %26 : vector<128x128xf32>
    %29 = math.exp %28 : vector<128x128xf32>
    %cst_17 = arith.constant dense<0.000000e+00> : vector<128xf32>
    %30 = vector.multi_reduction <add>, %29, %cst_17 [1] : vector<128x128xf32> to vector<128xf32>
    %31 = vector.shape_cast %30 : vector<128xf32> to vector<128x1xf32>
    %32 = arith.addf %24, %31 : vector<128x1xf32>
    %c0_18 = arith.constant 0 : index
    %c0_19 = arith.constant 0 : index
    %33 = vector.load %arg9[%c0_18, %c0_19] : memref<128x1xf32, #tpu.memory_space<vmem>>, vector<128x1xf32>
    tpu.vector_store %arg9[%c0_18, %c0_19], %32 {strides = array<i32>} : memref<128x1xf32, #tpu.memory_space<vmem>>, vector<128x1xf32>,
    %c0_20 = arith.constant 0 : index
    %c0_21 = arith.constant 0 : index
    %34 = vector.load %arg8[%c0_20, %c0_21] : memref<128x1xf32, #tpu.memory_space<vmem>>, vector<128x1xf32>
    tpu.vector_store %arg8[%c0_20, %c0_21], %18 {strides = array<i32>} : memref<128x1xf32, #tpu.memory_space<vmem>>, vector<128x1xf32>,
    %c1_i32 = arith.constant 1 : i32
    %35 = arith.cmpi eq, %arg2, %c1_i32 : i32
    %36 = arith.extui %35 : i1 to i32
    %c0_i32_22 = arith.constant 0 : i32
    %37 = arith.cmpi ne, %36, %c0_i32_22 : i32
    scf.if %37 {
      %c0_23 = arith.constant 0 : index
      %c0_24 = arith.constant 0 : index
      %38 = vector.load %arg8[%c0_23, %c0_24] : memref<128x1xf32, #tpu.memory_space<vmem>>, vector<128x1xf32>
      %c0_25 = arith.constant 0 : index
      %c0_26 = arith.constant 0 : index
      %39 = vector.load %arg9[%c0_25, %c0_26] : memref<128x1xf32, #tpu.memory_space<vmem>>, vector<128x1xf32>
      %40 = math.log %39 : vector<128x1xf32>
      %cst_27 = arith.constant 5.54517746 : f32
      %41 = vector.broadcast %cst_27 : f32 to vector<128x1xf32>
      %42 = arith.subf %40, %41 : vector<128x1xf32>
      %cst_28 = arith.constant 1.000000e-01 : f32
      %43 = vector.broadcast %cst_28 : f32 to vector<128x1xf32>
      %44 = arith.mulf %43, %42 : vector<128x1xf32>
      %45 = arith.addf %38, %44 : vector<128x1xf32>
      %c0_29 = arith.constant 0 : index
      %c0_30 = arith.constant 0 : index
      %c0_31 = arith.constant 0 : index
      %46 = vector.load %arg7[%c0_29, %c0_30, %c0_31] : memref<1x128x1xf32, #tpu.memory_space<vmem>>, vector<1x128x1xf32>
      %47 = vector.shape_cast %46 : vector<1x128x1xf32> to vector<128x1xf32>
      %48 = vector.shape_cast %45 : vector<128x1xf32> to vector<1x128x1xf32>
      tpu.vector_store %arg7[%c0_29, %c0_30, %c0_31], %48 {strides = array<i32>} : memref<1x128x1xf32, #tpu.memory_space<vmem>>, vector<1x128x1xf32>,
    } else {
    }
    return
  }
  func.func @transform_0(%arg0: i32, %arg1: i32, %arg2: i32) -> (i32, i32, i32) {
    %c0_i32 = arith.constant 0 : i32
    %c0_i32_0 = arith.constant 0 : i32
    return %arg1, %c0_i32, %arg2 : i32, i32, i32
  }
  func.func @transform_1(%arg0: i32, %arg1: i32, %arg2: i32) -> (i32, i32) {
    %c0_i32 = arith.constant 0 : i32
    %c0_i32_0 = arith.constant 0 : i32
    return %arg0, %c0_i32 : i32, i32
  }
  func.func @transform_2(%arg0: i32, %arg1: i32, %arg2: i32) -> (i32, i32) {
    %c0_i32 = arith.constant 0 : i32
    %c0_i32_0 = arith.constant 0 : i32
    return %arg0, %c0_i32 : i32, i32
  }
  func.func @transform_3(%arg0: i32, %arg1: i32, %arg2: i32) -> (i32, i32, i32) {
    %c0_i32 = arith.constant 0 : i32
    return %arg1, %arg0, %arg2 : i32, i32, i32
  }
  func.func @transform_4(%arg0: i32, %arg1: i32, %arg2: i32) -> (i32, i32, i32) {
    %c0_i32 = arith.constant 0 : i32
    %c0_i32_0 = arith.constant 0 : i32
    return %arg1, %arg0, %c0_i32 : i32, i32, i32
  }
}

</mosaic_0001>

<llo_original>
// kernel: tpu_custom_call.1
$region0: #{tpu_custom_call.1}
  #allocation0 [shape = 'u32[]', space=smem, size = 0x4, offset = 0x4, fixed_abs, tag = 'smem constant byte address 0x4 - core index']
  #allocation1 [shape = 'u32[144,128]{1,0:T(1,128)}', space=vmem, size = 0x12000, scoped, tag = 'internal scratch']
  #allocation2 [shape = 'f32[128,1]{1,0:T(8,128)}', space=vmem, size = 0x10000, scoped, tag = 'scratch operand']
  #allocation3 [shape = 'f32[128,1]{1,0:T(8,128)}', space=vmem, size = 0x10000, scoped, tag = 'scratch operand']
  %s0 = inlined_call_operand.hbm [shape: f32[2,256,256], index: 0, kind: input, shape index: {}]
  %s1 = inlined_call_operand.vmem [shape: bf16[256,256], index: 1, kind: input, shape index: {}]
  %s2 = inlined_call_operand.vmem [shape: f32[256,1], index: 2, kind: input, shape index: {}]
  %s3 = inlined_call_operand.hbm [shape: bf16[2,256,256], index: 3, kind: output, shape index: {0}]
  %s4 = inlined_call_operand.vmem [shape: f32[2,256,1], index: 4, kind: output, shape index: {1}]
  %5 = xla_tuple %s3, %s4
  %s6 = sld [smem:[#allocation0]]
  $region65: #{tpu_custom_call.1} parent=0
    _
  %s8 = ssub.s32 1, %s6
  %s9 = scalar_select 0, %s8, %s6
  $region1: #{tpu_custom_call.1} parent=0
    #allocation4 [shape = 'u8[262144]{0}', space=vmem, size = 0x40000, scoped, tag = 'input window, operand 0']
    #allocation5 [shape = 's32[2]{0}', space=sflag, size = 0x8, scoped, tag = 'scoped memory for tpu_custom_call.1']
    #allocation6 [shape = 's32[2]{0}', space=sflag, size = 0x8, scoped, tag = 'scoped memory for tpu_custom_call.1']
    #allocation7 [shape = 'u8[65536]{0}', space=vmem, size = 0x10000, scoped, tag = 'output window, operand 0']
    %10 = vsyncpa [#allocation5], 0
    %s11 = scalar_lea.sflag [#allocation5], 1
    %12 = vsyncpa %s11, 0
    %13 = vsyncpa [#allocation6], 0
    %s14 = scalar_lea.sflag [#allocation6], 1
    %15 = vsyncpa %s14, 0
    loop: start=0, step=1, limit=10
    $region2: #{tpu_custom_call.1} parent=1 // loop_pre_header
      _
    $region3: #{tpu_custom_call.1} parent=1 // loop_header
      %s17 = sphi 0, %s21
      %p18 = scmp.ge.s32.totalorder %s17, 10
      %s24 = sphi 0, %s43
      %s25 = sphi 0, %s39
      %s26 = sphi 0, %s35
      %s27 = sphi 0, %s24
      %s28 = sphi 0, %s25
      %s29 = sphi 0, %s26
      %s30 = sphi 0, %s27
      %s31 = sphi 0, %s28
      %s32 = sphi 0, %s29
      %s48 = sphi 0, %s50
      %s51 = sphi 0, %s48
      %s52 = sphi 0, %s51
      %s68 = sphi 0, %s52
      %s74 = sphi 0, %s76
      %s77 = sphi 0, %s74
      %s78 = sphi 0, %s77
      %s94 = sphi 0, %s78
      %s100 = sphi 0, %s102
      %s103 = sphi 0, %s100
      %s104 = sphi 0, %s103
      %s120 = sphi 0, %s104
      %s130 = sphi 0, %s132
      %s133 = sphi 0, %s130
      %s134 = sphi 0, %s133
      %s150 = sphi 0, %s134
      %s158 = sphi 0, %s160
      %s161 = sphi 0, %s158
      %s162 = sphi 0, %s161
      %s178 = sphi 0, %s162
    $region4: #{tpu_custom_call.1} parent=1 // loop_header_branch
      %20 = sbr.rel (%p18) target = $region8
    $region5: #{tpu_custom_call.1} parent=1 // loop_body
      %s22 = ssub.s32 %s17, 1
      %s23 = ssub.s32 %s17, 2
      %s33 = sadd.s32 1, %s26
      %p34 = scmp.ge.s32.totalorder %s33, 2
      %s35 = scalar_select %p34, 0, %s33
      %s36 = sadd.s32 1, %s25
      %s37 = scalar_select %p34, %s36, %s25
      %p38 = scmp.ge.s32.totalorder %s37, 2
      %s39 = scalar_select %p38, 0, %s37
      %s40 = sadd.s32 1, %s24
      %s41 = scalar_select %p38, %s40, %s24
      %p42 = scmp.ge.s32.totalorder %s41, 2
      %s43 = scalar_select %p42, 0, %s41
      %s44 = ssub.s32 %s25, %s39
      %s45 = ssub.s32 %s26, %s35
      %s46 = sor.u32 %s44, %s45
      %p47 = scmp.eq.s32.totalorder %s46, 0
      %s49 = sadd.s32 %s48, 1
      %s50 = scalar_select %p47, %s48, %s49
      %p53 = pneg %p47
      %p54 = scmp.eq.s32.totalorder %s17, 7
      %p55 = por %p53, %p54
      %p56 = scmp.ne.s32.totalorder %s48, %s51
      %p57 = scmp.eq.s32.totalorder %s17, 0
      %p58 = por %p56, %p57
      %p59 = scmp.ne.s32.totalorder %s48, %s51
      %p60 = scmp.eq.s32.totalorder %s22, 7
      %p61 = por %p59, %p60
      %p62 = scmp.ne.s32.totalorder %s51, %s52
      %p63 = scmp.eq.s32.totalorder %s22, 0
      %p64 = por %p62, %p63
      %p65 = scmp.ne.s32.totalorder %s51, %s52
      %p66 = scmp.eq.s32.totalorder %s23, 7
      %p67 = por %p65, %p66
      %p69 = scmp.ne.s32.totalorder %s52, %s68
      %p70 = scmp.eq.s32.totalorder %s23, 0
      %p71 = por %p69, %p70
      %s72 = ssub.s32 %s24, %s43
      %p73 = scmp.eq.s32.totalorder %s72, 0
      %s75 = sadd.s32 %s74, 1
      %s76 = scalar_select %p73, %s74, %s75
      %p79 = pneg %p73
      %p80 = scmp.eq.s32.totalorder %s17, 7
      %p81 = por %p79, %p80
      %p82 = scmp.ne.s32.totalorder %s74, %s77
      %p83 = scmp.eq.s32.totalorder %s17, 0
      %p84 = por %p82, %p83
      %p85 = scmp.ne.s32.totalorder %s74, %s77
      %p86 = scmp.eq.s32.totalorder %s22, 7
      %p87 = por %p85, %p86
      %p88 = scmp.ne.s32.totalorder %s77, %s78
      %p89 = scmp.eq.s32.totalorder %s22, 0
      %p90 = por %p88, %p89
      %p91 = scmp.ne.s32.totalorder %s77, %s78
      %p92 = scmp.eq.s32.totalorder %s23, 7
      %p93 = por %p91, %p92
      %p95 = scmp.ne.s32.totalorder %s78, %s94
      %p96 = scmp.eq.s32.totalorder %s23, 0
      %p97 = por %p95, %p96
      %s98 = ssub.s32 %s24, %s43
      %p99 = scmp.eq.s32.totalorder %s98, 0
      %s101 = sadd.s32 %s100, 1
      %s102 = scalar_select %p99, %s100, %s101
      %p105 = pneg %p99
      %p106 = scmp.eq.s32.totalorder %s17, 7
      %p107 = por %p105, %p106
      %p108 = scmp.ne.s32.totalorder %s100, %s103
      %p109 = scmp.eq.s32.totalorder %s17, 0
      %p110 = por %p108, %p109
      %p111 = scmp.ne.s32.totalorder %s100, %s103
      %p112 = scmp.eq.s32.totalorder %s22, 7
      %p113 = por %p111, %p112
      %p114 = scmp.ne.s32.totalorder %s103, %s104
      %p115 = scmp.eq.s32.totalorder %s22, 0
      %p116 = por %p114, %p115
      %p117 = scmp.ne.s32.totalorder %s103, %s104
      %p118 = scmp.eq.s32.totalorder %s23, 7
      %p119 = por %p117, %p118
      %p121 = scmp.ne.s32.totalorder %s104, %s120
      %p122 = scmp.eq.s32.totalorder %s23, 0
      %p123 = por %p121, %p122
      %s124 = ssub.s32 %s25, %s39
      %s125 = ssub.s32 %s24, %s43
      %s126 = sor.u32 %s124, %s125
      %s127 = ssub.s32 %s26, %s35
      %s128 = sor.u32 %s126, %s127
      %p129 = scmp.eq.s32.totalorder %s128, 0
      %s131 = sadd.s32 %s130, 1
      %s132 = scalar_select %p129, %s130, %s131
      %p135 = pneg %p129
      %p136 = scmp.eq.s32.totalorder %s17, 7
      %p137 = por %p135, %p136
      %p138 = scmp.ne.s32.totalorder %s130, %s133
      %p139 = scmp.eq.s32.totalorder %s17, 0
      %p140 = por %p138, %p139
      %p141 = scmp.ne.s32.totalorder %s130, %s133
      %p142 = scmp.eq.s32.totalorder %s22, 7
      %p143 = por %p141, %p142
      %p144 = scmp.ne.s32.totalorder %s133, %s134
      %p145 = scmp.eq.s32.totalorder %s22, 0
      %p146 = por %p144, %p145
      %p147 = scmp.ne.s32.totalorder %s133, %s134
      %p148 = scmp.eq.s32.totalorder %s23, 7
      %p149 = por %p147, %p148
      %p151 = scmp.ne.s32.totalorder %s134, %s150
      %p152 = scmp.eq.s32.totalorder %s23, 0
      %p153 = por %p151, %p152
      %s154 = ssub.s32 %s25, %s39
      %s155 = ssub.s32 %s24, %s43
      %s156 = sor.u32 %s154, %s155
      %p157 = scmp.eq.s32.totalorder %s156, 0
      %s159 = sadd.s32 %s158, 1
      %s160 = scalar_select %p157, %s158, %s159
      %p163 = pneg %p157
      %p164 = scmp.eq.s32.totalorder %s17, 7
      %p165 = por %p163, %p164
      %p166 = scmp.ne.s32.totalorder %s158, %s161
      %p167 = scmp.eq.s32.totalorder %s17, 0
      %p168 = por %p166, %p167
      %p169 = scmp.ne.s32.totalorder %s158, %s161
      %p170 = scmp.eq.s32.totalorder %s22, 7
      %p171 = por %p169, %p170
      %p172 = scmp.ne.s32.totalorder %s161, %s162
      %p173 = scmp.eq.s32.totalorder %s22, 0
      %p174 = por %p172, %p173
      %p175 = scmp.ne.s32.totalorder %s161, %s162
      %p176 = scmp.eq.s32.totalorder %s23, 7
      %p177 = por %p175, %p176
      %p179 = scmp.ne.s32.totalorder %s162, %s178
      %p180 = scmp.eq.s32.totalorder %s23, 0
      %p181 = por %p179, %p180
      %p182 = scmp.le.s32.totalorder 1, %s17
      %p183 = scmp.lt.s32.totalorder %s17, 9
      %p184 = pnand %p182, %p183
      %p185 = pneg %p184
      // Predicated region
      $region9: #{tpu_custom_call.1} parent=5 // pred_check
        _
      $region10: #{tpu_custom_call.1} parent=5 // pred_check_branch
        %187 = sbr.rel (%p184) target = $region12
      $region11: #{tpu_custom_call.1} parent=5 // pred_region
        %s188 = ssub.s32 %s17, 1
      $region12: #{tpu_custom_call.1} parent=5 // pred_fallthru
        _
      %p189 = scmp.lt.s32.totalorder %s17, 8
      // Predicated region
      $region13: #{tpu_custom_call.1} parent=5 // pred_check
        %p190 = pneg %p189
      $region14: #{tpu_custom_call.1} parent=5 // pred_check_branch
        %192 = sbr.rel (%p190) target = $region16
      $region15: #{tpu_custom_call.1} parent=5 // pred_region
        // Predicated region
        $region17: #{tpu_custom_call.1} parent=15 // pred_check
          %p193 = pneg %p58
        $region18: #{tpu_custom_call.1} parent=15 // pred_check_branch
          %195 = sbr.rel (%p193) target = $region20
        $region19: #{tpu_custom_call.1} parent=15 // pred_region
          %s196 = sand.u32 %s48, 1
          %s197 = scalar_lea.sflag [#allocation5], %s196
          %s198 = sand.u32 %s48, 1
          %s199 = smul.addr %s198, 256
          %s200 = scalar_lea.vmem [#allocation4], %s199
          %s202 = ssub.s32 4096, 4096
          %203 = vsyncadd %s197, %s202
          %s204 = smul.addr %s25, 64
          %s205 = sadd.s32 %s26, %s204
          %s206 = smul.addr %s205, 128
          %s207 = scalar_lea.hbm %s0, %s206
          %s208 = sshll.u32 %s200, 4
          %s209 = int_to_ptr.vmem [resolvable:$true] %s208
          %214 = dma.hbm_to_vmem [thread:$0]  %s207, 4096, %s209, %s197, 256, 128, 8
        $region20: #{tpu_custom_call.1} parent=15 // pred_fallthru
          _
        // Predicated region
        $region21: #{tpu_custom_call.1} parent=15 // pred_check
          %p215 = pneg %p84
        $region22: #{tpu_custom_call.1} parent=15 // pred_check_branch
          %217 = sbr.rel (%p215) target = $region24
        $region23: #{tpu_custom_call.1} parent=15 // pred_region
          %s218 = smul.u32 16, %s24
          %p219 = scmp.lt.s32.totalorder %s218, 31
          %s220 = scalar_select %p219, %s218, 31
          %s221 = smul.addr %s220, 2
          %s222 = smul.addr %s221, 4
          %s223 = scalar_lea.vmem %s1, %s222
          %s224 = smul.u32 16, %s24
        $region24: #{tpu_custom_call.1} parent=15 // pred_fallthru
          _
        // Predicated region
        $region25: #{tpu_custom_call.1} parent=15 // pred_check
          %p225 = pneg %p110
        $region26: #{tpu_custom_call.1} parent=15 // pred_check_branch
          %227 = sbr.rel (%p225) target = $region28
        $region27: #{tpu_custom_call.1} parent=15 // pred_region
          %s228 = smul.u32 16, %s24
          %p229 = scmp.lt.s32.totalorder %s228, 31
          %s230 = scalar_select %p229, %s228, 31
          %s231 = smul.addr %s230, 8
          %s232 = scalar_lea.vmem %s2, %s231
          %s233 = smul.u32 16, %s24
        $region28: #{tpu_custom_call.1} parent=15 // pred_fallthru
          _
      $region16: #{tpu_custom_call.1} parent=5 // pred_fallthru
        _
      %p234 = scmp.le.s32.totalorder 1, %s17
      %p235 = scmp.lt.s32.totalorder %s17, 9
      %p236 = pnand %p234, %p235
      %p237 = pneg %p236
      // Predicated region
      $region29: #{tpu_custom_call.1} parent=5 // pred_check
        _
      $region30: #{tpu_custom_call.1} parent=5 // pred_check_branch
        %239 = sbr.rel (%p236) target = $region32
      $region31: #{tpu_custom_call.1} parent=5 // pred_region
        %s240 = ssub.s32 %s17, 1
        %s241 = sand.u32 %s51, 1
        %s242 = scalar_lea.sflag [#allocation5], %s241
        %s243 = sand.u32 %s51, 1
        %s244 = smul.addr %s243, 256
        %s245 = scalar_lea.vmem [#allocation4], %s244
        // Predicated region
        $region33: #{tpu_custom_call.1} parent=31 // pred_check
          %p246 = pneg %p64
        $region34: #{tpu_custom_call.1} parent=31 // pred_check_branch
          %248 = sbr.rel (%p246) target = $region36
        $region35: #{tpu_custom_call.1} parent=31 // pred_region
          %249 = dma.done %s242, 4096
        $region36: #{tpu_custom_call.1} parent=31 // pred_fallthru
          _
        %s250 = sand.u32 %s51, 1
        %s251 = scalar_lea.sflag [#allocation5], %s250
        %s252 = sand.u32 %s51, 1
        %s253 = smul.addr %s252, 256
        %s254 = scalar_lea.vmem [#allocation4], %s253
        %p255 = pneg %p64
        %p256 = pneg %p61
        %s257 = smul.u32 16, %s27
        %p258 = scmp.lt.s32.totalorder %s257, 31
        %s259 = scalar_select %p258, %s257, 31
        %s260 = smul.addr %s259, 2
        %s261 = smul.addr %s260, 4
        %s262 = scalar_lea.vmem %s1, %s261
        %p263 = pneg %p90
        %p264 = pneg %p87
        %s265 = smul.u32 16, %s27
        %p266 = scmp.lt.s32.totalorder %s265, 31
        %s267 = scalar_select %p266, %s265, 31
        %s268 = smul.addr %s267, 8
        %s269 = scalar_lea.vmem %s2, %s268
        %p270 = pneg %p116
        %p271 = pneg %p113
        %p272 = pneg %p146
        %p273 = pneg %p143
        %s274 = sand.u32 %s133, 1
        %s275 = scalar_lea.sflag [#allocation6], %s274
        %s276 = sand.u32 %s133, 1
        %s277 = smul.addr %s276, 64
        %s278 = scalar_lea.vmem [#allocation7], %s277
        %p279 = pneg %p174
        %p280 = pneg %p171
        %s281 = smul.u32 16, %s27
        %p282 = scmp.lt.s32.totalorder %s28, 1
        %s283 = scalar_select %p282, %s28, 1
        %p284 = scmp.lt.s32.totalorder %s281, 31
        %s285 = scalar_select %p284, %s281, 31
        %s286 = smul.addr %s283, 32
        %s287 = sadd.s32 %s285, %s286
        %s288 = smul.addr %s287, 8
        %s289 = scalar_lea.vmem %s4, %s288
        %s290 = smul.u32 16, %s27
        %p291 = scmp.lt.s32.totalorder %s290, 31
        %s292 = scalar_select %p291, %s290, 31
        %s293 = smul.addr %s292, 2
        %s294 = smul.addr %s293, 4
        %s295 = scalar_lea.vmem %s1, %s294
        %s296 = smul.u32 16, %s27
        %s297 = smul.u32 16, %s27
        %p298 = scmp.lt.s32.totalorder %s297, 31
        %s299 = scalar_select %p298, %s297, 31
        %s300 = smul.addr %s299, 8
        %s301 = scalar_lea.vmem %s2, %s300
        %s302 = smul.u32 16, %s27
        %s303 = smul.u32 16, %s27
        %s304 = smul.u32 16, %s27
        %p305 = scmp.lt.s32.totalorder %s28, 1
        %s306 = scalar_select %p305, %s28, 1
        %p307 = scmp.lt.s32.totalorder %s304, 31
        %s308 = scalar_select %p307, %s304, 31
        %s309 = smul.addr %s306, 32
        %s310 = sadd.s32 %s308, %s309
        %s311 = smul.addr %s310, 8
        %s312 = scalar_lea.vmem %s4, %s311
        %s313 = smul.u32 16, %s27
        %p315 = scmp.eq.s32.totalorder %s29, 0
        // Predicated region
        $region37: #{tpu_custom_call.1} parent=31 // pred_check
          %p316 = pneg %p315
        $region38: #{tpu_custom_call.1} parent=31 // pred_check_branch
          %318 = sbr.rel (%p316) target = $region40
        $region39: #{tpu_custom_call.1} parent=31 // pred_region
          %vm319 = vcmask 7168
          %320 = vst.msk [vmem:[#allocation2] sm:$0xff] %vm319, -inf
          %321 = vst.msk [vmem:[#allocation2 + $0x8] sm:$0xff] %vm319, -inf
          %322 = vst.msk [vmem:[#allocation2 + $0x10] sm:$0xff] %vm319, -inf
          %323 = vst.msk [vmem:[#allocation2 + $0x18] sm:$0xff] %vm319, -inf
          %324 = vst.msk [vmem:[#allocation2 + $0x20] sm:$0xff] %vm319, -inf
          %325 = vst.msk [vmem:[#allocation2 + $0x28] sm:$0xff] %vm319, -inf
          %326 = vst.msk [vmem:[#allocation2 + $0x30] sm:$0xff] %vm319, -inf
          %327 = vst.msk [vmem:[#allocation2 + $0x38] sm:$0xff] %vm319, -inf
          %328 = vst.msk [vmem:[#allocation2 + $0x40] sm:$0xff] %vm319, -inf
          %329 = vst.msk [vmem:[#allocation2 + $0x48] sm:$0xff] %vm319, -inf
          %330 = vst.msk [vmem:[#allocation2 + $0x50] sm:$0xff] %vm319, -inf
          %331 = vst.msk [vmem:[#allocation2 + $0x58] sm:$0xff] %vm319, -inf
          %332 = vst.msk [vmem:[#allocation2 + $0x60] sm:$0xff] %vm319, -inf
          %333 = vst.msk [vmem:[#allocation2 + $0x68] sm:$0xff] %vm319, -inf
          %334 = vst.msk [vmem:[#allocation2 + $0x70] sm:$0xff] %vm319, -inf
          %335 = vst.msk [vmem:[#allocation2 + $0x78] sm:$0xff] %vm319, -inf
          %336 = vst.msk [vmem:[#allocation3] sm:$0xff] %vm319, 0.0
          %337 = vst.msk [vmem:[#allocation3 + $0x8] sm:$0xff] %vm319, 0.0
          %338 = vst.msk [vmem:[#allocation3 + $0x10] sm:$0xff] %vm319, 0.0
          %339 = vst.msk [vmem:[#allocation3 + $0x18] sm:$0xff] %vm319, 0.0
          %340 = vst.msk [vmem:[#allocation3 + $0x20] sm:$0xff] %vm319, 0.0
          %341 = vst.msk [vmem:[#allocation3 + $0x28] sm:$0xff] %vm319, 0.0
          %342 = vst.msk [vmem:[#allocation3 + $0x30] sm:$0xff] %vm319, 0.0
          %343 = vst.msk [vmem:[#allocation3 + $0x38] sm:$0xff] %vm319, 0.0
          %344 = vst.msk [vmem:[#allocation3 + $0x40] sm:$0xff] %vm319, 0.0
          %345 = vst.msk [vmem:[#allocation3 + $0x48] sm:$0xff] %vm319, 0.0
          %346 = vst.msk [vmem:[#allocation3 + $0x50] sm:$0xff] %vm319, 0.0
          %347 = vst.msk [vmem:[#allocation3 + $0x58] sm:$0xff] %vm319, 0.0
          %348 = vst.msk [vmem:[#allocation3 + $0x60] sm:$0xff] %vm319, 0.0
          %349 = vst.msk [vmem:[#allocation3 + $0x68] sm:$0xff] %vm319, 0.0
          %350 = vst.msk [vmem:[#allocation3 + $0x70] sm:$0xff] %vm319, 0.0
          %351 = vst.msk [vmem:[#allocation3 + $0x78] sm:$0xff] %vm319, 0.0
        $region40: #{tpu_custom_call.1} parent=31 // pred_fallthru
          _
        %v352 = vld [vmem:[%s245] sm:$0xff]
        %v353 = vld [vmem:[%s245 + $0x8] sm:$0xff]
        %v354 = vld [vmem:[%s245 + $0x10] sm:$0xff]
        %v355 = vld [vmem:[%s245 + $0x18] sm:$0xff]
        %v356 = vld [vmem:[%s245 + $0x20] sm:$0xff]
        %v357 = vld [vmem:[%s245 + $0x28] sm:$0xff]
        %v358 = vld [vmem:[%s245 + $0x30] sm:$0xff]
        %v359 = vld [vmem:[%s245 + $0x38] sm:$0xff]
        %v360 = vld [vmem:[%s245 + $0x40] sm:$0xff]
        %v361 = vld [vmem:[%s245 + $0x48] sm:$0xff]
        %v362 = vld [vmem:[%s245 + $0x50] sm:$0xff]
        %v363 = vld [vmem:[%s245 + $0x58] sm:$0xff]
        %v364 = vld [vmem:[%s245 + $0x60] sm:$0xff]
        %v365 = vld [vmem:[%s245 + $0x68] sm:$0xff]
        %v366 = vld [vmem:[%s245 + $0x70] sm:$0xff]
        %v367 = vld [vmem:[%s245 + $0x78] sm:$0xff]
        %v368 = vld [vmem:[%s245 + $0x80] sm:$0xff]
        %v369 = vld [vmem:[%s245 + $0x88] sm:$0xff]
        %v370 = vld [vmem:[%s245 + $0x90] sm:$0xff]
        %v371 = vld [vmem:[%s245 + $0x98] sm:$0xff]
        %v372 = vld [vmem:[%s245 + $0xa0] sm:$0xff]
        %v373 = vld [vmem:[%s245 + $0xa8] sm:$0xff]
        %v374 = vld [vmem:[%s245 + $0xb0] sm:$0xff]
        %v375 = vld [vmem:[%s245 + $0xb8] sm:$0xff]
        %v376 = vld [vmem:[%s245 + $0xc0] sm:$0xff]
        %v377 = vld [vmem:[%s245 + $0xc8] sm:$0xff]
        %v378 = vld [vmem:[%s245 + $0xd0] sm:$0xff]
        %v379 = vld [vmem:[%s245 + $0xd8] sm:$0xff]
        %v380 = vld [vmem:[%s245 + $0xe0] sm:$0xff]
        %v381 = vld [vmem:[%s245 + $0xe8] sm:$0xff]
        %v382 = vld [vmem:[%s245 + $0xf0] sm:$0xff]
        %v383 = vld [vmem:[%s245 + $0xf8] sm:$0xff]
        %v384 = vpack.c.bf16 %v353, %v352
        %v385 = vpack.c.bf16 %v355, %v354
        %v386 = vpack.c.bf16 %v357, %v356
        %v387 = vpack.c.bf16 %v359, %v358
        %v388 = vpack.c.bf16 %v361, %v360
        %v389 = vpack.c.bf16 %v363, %v362
        %v390 = vpack.c.bf16 %v365, %v364
        %v391 = vpack.c.bf16 %v367, %v366
        %v392 = vpack.c.bf16 %v369, %v368
        %v393 = vpack.c.bf16 %v371, %v370
        %v394 = vpack.c.bf16 %v373, %v372
        %v395 = vpack.c.bf16 %v375, %v374
        %v396 = vpack.c.bf16 %v377, %v376
        %v397 = vpack.c.bf16 %v379, %v378
        %v398 = vpack.c.bf16 %v381, %v380
        %v399 = vpack.c.bf16 %v383, %v382
        %v400 = vld [vmem:[%s295] sm:$0xff]
        %v401 = vld [vmem:[%s295 + $0x8] sm:$0xff]
        %v402 = vld [vmem:[%s295 + $0x10] sm:$0xff]
        %v403 = vld [vmem:[%s295 + $0x18] sm:$0xff]
        %v404 = vld [vmem:[%s295 + $0x20] sm:$0xff]
        %v405 = vld [vmem:[%s295 + $0x28] sm:$0xff]
        %v406 = vld [vmem:[%s295 + $0x30] sm:$0xff]
        %v407 = vld [vmem:[%s295 + $0x38] sm:$0xff]
        %v408 = vld [vmem:[%s295 + $0x40] sm:$0xff]
        %v409 = vld [vmem:[%s295 + $0x48] sm:$0xff]
        %v410 = vld [vmem:[%s295 + $0x50] sm:$0xff]
        %v411 = vld [vmem:[%s295 + $0x58] sm:$0xff]
        %v412 = vld [vmem:[%s295 + $0x60] sm:$0xff]
        %v413 = vld [vmem:[%s295 + $0x68] sm:$0xff]
        %v414 = vld [vmem:[%s295 + $0x70] sm:$0xff]
        %v415 = vld [vmem:[%s295 + $0x78] sm:$0xff]
        %v416 = vld [vmem:[%s301] sm:$0xff]
        %v417 = vld [vmem:[%s301 + $0x8] sm:$0xff]
        %v418 = vld [vmem:[%s301 + $0x10] sm:$0xff]
        %v419 = vld [vmem:[%s301 + $0x18] sm:$0xff]
        %v420 = vld [vmem:[%s301 + $0x20] sm:$0xff]
        %v421 = vld [vmem:[%s301 + $0x28] sm:$0xff]
        %v422 = vld [vmem:[%s301 + $0x30] sm:$0xff]
        %v423 = vld [vmem:[%s301 + $0x38] sm:$0xff]
        %v424 = vld [vmem:[%s301 + $0x40] sm:$0xff]
        %v425 = vld [vmem:[%s301 + $0x48] sm:$0xff]
        %v426 = vld [vmem:[%s301 + $0x50] sm:$0xff]
        %v427 = vld [vmem:[%s301 + $0x58] sm:$0xff]
        %v428 = vld [vmem:[%s301 + $0x60] sm:$0xff]
        %v429 = vld [vmem:[%s301 + $0x68] sm:$0xff]
        %v430 = vld [vmem:[%s301 + $0x70] sm:$0xff]
        %v431 = vld [vmem:[%s301 + $0x78] sm:$0xff]
        %433 = vset.pattern.permute.xlu0 0
        %434 = vperm.xlu0 %433, %v416
        %v435 = vpop.permute.xlu0 %434
        %438 = vset.pattern.permute.xlu0 0
        %439 = vperm.xlu0 %438, %v417
        %v440 = vpop.permute.xlu0 %439
        %443 = vset.pattern.permute.xlu0 0
        %444 = vperm.xlu0 %443, %v418
        %v445 = vpop.permute.xlu0 %444
        %448 = vset.pattern.permute.xlu0 0
        %449 = vperm.xlu0 %448, %v419
        %v450 = vpop.permute.xlu0 %449
        %453 = vset.pattern.permute.xlu0 0
        %454 = vperm.xlu0 %453, %v420
        %v455 = vpop.permute.xlu0 %454
        %458 = vset.pattern.permute.xlu0 0
        %459 = vperm.xlu0 %458, %v421
        %v460 = vpop.permute.xlu0 %459
        %463 = vset.pattern.permute.xlu0 0
        %464 = vperm.xlu0 %463, %v422
        %v465 = vpop.permute.xlu0 %464
        %468 = vset.pattern.permute.xlu0 0
        %469 = vperm.xlu0 %468, %v423
        %v470 = vpop.permute.xlu0 %469
        %473 = vset.pattern.permute.xlu0 0
        %474 = vperm.xlu0 %473, %v424
        %v475 = vpop.permute.xlu0 %474
        %478 = vset.pattern.permute.xlu0 0
        %479 = vperm.xlu0 %478, %v425
        %v480 = vpop.permute.xlu0 %479
        %483 = vset.pattern.permute.xlu0 0
        %484 = vperm.xlu0 %483, %v426
        %v485 = vpop.permute.xlu0 %484
        %488 = vset.pattern.permute.xlu0 0
        %489 = vperm.xlu0 %488, %v427
        %v490 = vpop.permute.xlu0 %489
        %493 = vset.pattern.permute.xlu0 0
        %494 = vperm.xlu0 %493, %v428
        %v495 = vpop.permute.xlu0 %494
        %498 = vset.pattern.permute.xlu0 0
        %499 = vperm.xlu0 %498, %v429
        %v500 = vpop.permute.xlu0 %499
        %503 = vset.pattern.permute.xlu0 0
        %504 = vperm.xlu0 %503, %v430
        %v505 = vpop.permute.xlu0 %504
        %508 = vset.pattern.permute.xlu0 0
        %509 = vperm.xlu0 %508, %v431
        %v510 = vpop.permute.xlu0 %509
        %v528 = vunpack.c.l.b16 %v400
        %v529 = vunpack.c.h.b16 %v400
        %v530 = vunpack.c.l.b16 %v401
        %v531 = vunpack.c.h.b16 %v401
        %v532 = vunpack.c.l.b16 %v402
        %v533 = vunpack.c.h.b16 %v402
        %v534 = vunpack.c.l.b16 %v403
        %v535 = vunpack.c.h.b16 %v403
        %v536 = vunpack.c.l.b16 %v404
        %v537 = vunpack.c.h.b16 %v404
        %v538 = vunpack.c.l.b16 %v405
        %v539 = vunpack.c.h.b16 %v405
        %v540 = vunpack.c.l.b16 %v406
        %v541 = vunpack.c.h.b16 %v406
        %v542 = vunpack.c.l.b16 %v407
        %v543 = vunpack.c.h.b16 %v407
        %v544 = vunpack.c.l.b16 %v408
        %v545 = vunpack.c.h.b16 %v408
        %v546 = vunpack.c.l.b16 %v409
        %v547 = vunpack.c.h.b16 %v409
        %v548 = vunpack.c.l.b16 %v410
        %v549 = vunpack.c.h.b16 %v410
        %v550 = vunpack.c.l.b16 %v411
        %v551 = vunpack.c.h.b16 %v411
        %v552 = vunpack.c.l.b16 %v412
        %v553 = vunpack.c.h.b16 %v412
        %v554 = vunpack.c.l.b16 %v413
        %v555 = vunpack.c.h.b16 %v413
        %v556 = vunpack.c.l.b16 %v414
        %v557 = vunpack.c.h.b16 %v414
        %v558 = vunpack.c.l.b16 %v415
        %v559 = vunpack.c.h.b16 %v415
        %v560 = vpack.c.b16 %v530, %v528
        %v561 = vpack.c.b16 %v531, %v529
        %v562 = vpack.c.b16 %v534, %v532
        %v563 = vpack.c.b16 %v535, %v533
        %v564 = vpack.c.b16 %v538, %v536
        %v565 = vpack.c.b16 %v539, %v537
        %v566 = vpack.c.b16 %v542, %v540
        %v567 = vpack.c.b16 %v543, %v541
        %v568 = vpack.c.b16 %v546, %v544
        %v569 = vpack.c.b16 %v547, %v545
        %v570 = vpack.c.b16 %v550, %v548
        %v571 = vpack.c.b16 %v551, %v549
        %v572 = vpack.c.b16 %v554, %v552
        %v573 = vpack.c.b16 %v555, %v553
        %v574 = vpack.c.b16 %v558, %v556
        %v575 = vpack.c.b16 %v559, %v557
        %592 = vmatprep.subr.bf16.mxu0 0
        %593 = vmatpush1.bf16.msra.mxu0 %v384
        %594 = vmatprep.subr.bf16.mxu0 0
        %595 = vmatpush1.bf16.msra.mxu0 %v385
        %596 = vmatprep.subr.bf16.mxu0 0
        %597 = vmatpush1.bf16.msra.mxu0 %v386
        %598 = vmatprep.subr.bf16.mxu0 0
        %599 = vmatpush1.bf16.msra.mxu0 %v387
        %600 = vmatprep.subr.bf16.mxu0 0
        %601 = vmatpush1.bf16.msra.mxu0 %v388
        %602 = vmatprep.subr.bf16.mxu0 0
        %603 = vmatpush1.bf16.msra.mxu0 %v389
        %604 = vmatprep.subr.bf16.mxu0 0
        %605 = vmatpush1.bf16.msra.mxu0 %v390
        %606 = vmatprep.subr.bf16.mxu0 0
        %607 = vmatpush1.bf16.msra.mxu0 %v391
        %608 = vmatprep.subr.bf16.mxu0 0
        %609 = vmatpush1.bf16.msra.mxu0 %v392
        %610 = vmatprep.subr.bf16.mxu0 0
        %611 = vmatpush1.bf16.msra.mxu0 %v393
        %612 = vmatprep.subr.bf16.mxu0 0
        %613 = vmatpush1.bf16.msra.mxu0 %v394
        %614 = vmatprep.subr.bf16.mxu0 0
        %615 = vmatpush1.bf16.msra.mxu0 %v395
        %616 = vmatprep.subr.bf16.mxu0 0
        %617 = vmatpush1.bf16.msra.mxu0 %v396
        %618 = vmatprep.subr.bf16.mxu0 0
        %619 = vmatpush1.bf16.msra.mxu0 %v397
        %620 = vmatprep.subr.bf16.mxu0 0
        %621 = vmatpush1.bf16.msra.mxu0 %v398
        %622 = vmatprep.subr.bf16.mxu0 0
        %623 = vmatpush1.bf16.msra.mxu0 %v399
        %624 = vmatprep.mubr.bf16.mxu0 %v561
        %625 = vmatmul.mubr.bf16.gmra.mrb[0].mxu0 %v560
        %v626 = vpop.f32.mrb[0].mxu0
        %v627 = vadd.f32 %v435, %v626
        %v628 = vpop.f32.mrb[0].mxu0
        %v629 = vpop.f32.mrb[0].mxu0
        %v630 = vadd.f32 %v440, %v629
        %v631 = vpop.f32.mrb[0].mxu0
        %632 = vmatprep.mubr.bf16.mxu0 %v563
        %633 = vmatmul.mubr.bf16.gmra.mrb[0].mxu0 %v562
        %v634 = vpop.f32.mrb[0].mxu0
        %v635 = vadd.f32 %v445, %v634
        %v636 = vpop.f32.mrb[0].mxu0
        %v637 = vpop.f32.mrb[0].mxu0
        %v638 = vadd.f32 %v450, %v637
        %v639 = vpop.f32.mrb[0].mxu0
        %640 = vmatprep.mubr.bf16.mxu0 %v565
        %641 = vmatmul.mubr.bf16.gmra.mrb[0].mxu0 %v564
        %v642 = vpop.f32.mrb[0].mxu0
        %v643 = vadd.f32 %v455, %v642
        %v644 = vpop.f32.mrb[0].mxu0
        %v645 = vpop.f32.mrb[0].mxu0
        %v646 = vadd.f32 %v460, %v645
        %v647 = vpop.f32.mrb[0].mxu0
        %648 = vmatprep.mubr.bf16.mxu0 %v567
        %649 = vmatmul.mubr.bf16.gmra.mrb[0].mxu0 %v566
        %v650 = vpop.f32.mrb[0].mxu0
        %v651 = vadd.f32 %v465, %v650
        %v652 = vpop.f32.mrb[0].mxu0
        %v653 = vpop.f32.mrb[0].mxu0
        %v654 = vadd.f32 %v470, %v653
        %v655 = vpop.f32.mrb[0].mxu0
        %656 = vmatprep.mubr.bf16.mxu0 %v569
        %657 = vmatmul.mubr.bf16.gmra.mrb[0].mxu0 %v568
        %v658 = vpop.f32.mrb[0].mxu0
        %v659 = vadd.f32 %v475, %v658
        %v660 = vpop.f32.mrb[0].mxu0
        %v661 = vpop.f32.mrb[0].mxu0
        %v662 = vadd.f32 %v480, %v661
        %v663 = vpop.f32.mrb[0].mxu0
        %664 = vmatprep.mubr.bf16.mxu0 %v571
        %665 = vmatmul.mubr.bf16.gmra.mrb[0].mxu0 %v570
        %v666 = vpop.f32.mrb[0].mxu0
        %v667 = vadd.f32 %v485, %v666
        %v668 = vpop.f32.mrb[0].mxu0
        %v669 = vpop.f32.mrb[0].mxu0
        %v670 = vadd.f32 %v490, %v669
        %v671 = vpop.f32.mrb[0].mxu0
        %672 = vmatprep.mubr.bf16.mxu0 %v573
        %673 = vmatmul.mubr.bf16.gmra.mrb[0].mxu0 %v572
        %v674 = vpop.f32.mrb[0].mxu0
        %v675 = vadd.f32 %v495, %v674
        %v676 = vpop.f32.mrb[0].mxu0
        %v677 = vpop.f32.mrb[0].mxu0
        %v678 = vadd.f32 %v500, %v677
        %v679 = vpop.f32.mrb[0].mxu0
        %680 = vmatprep.mubr.bf16.mxu0 %v575
        %681 = vmatmul.mubr.bf16.gmra.mrb[0].mxu0 %v574
        %v682 = vpop.f32.mrb[0].mxu0
        %v683 = vadd.f32 %v505, %v682
        %v684 = vpop.f32.mrb[0].mxu0
        %v685 = vpop.f32.mrb[0].mxu0
        %v686 = vadd.f32 %v510, %v685
        %v687 = vpop.f32.mrb[0].mxu0
        %688 = vdwg.mxu0
        %v689 = vpack.c.bf16 %v630, %v627
        %v690 = vpack.c.bf16 %v638, %v635
        %v691 = vpack.c.bf16 %v646, %v643
        %v692 = vpack.c.bf16 %v654, %v651
        %v693 = vpack.c.bf16 %v662, %v659
        %v694 = vpack.c.bf16 %v670, %v667
        %v695 = vpack.c.bf16 %v678, %v675
        %v696 = vpack.c.bf16 %v686, %v683
        %v705 = vunpack.c.l.b16 %v689
        %v706 = vunpack.c.h.b16 %v689
        %v707 = vunpack.c.l.b16 %v690
        %v708 = vunpack.c.h.b16 %v690
        %v709 = vunpack.c.l.b16 %v691
        %v710 = vunpack.c.h.b16 %v691
        %v711 = vunpack.c.l.b16 %v692
        %v712 = vunpack.c.h.b16 %v692
        %v713 = vunpack.c.l.b16 %v693
        %v714 = vunpack.c.h.b16 %v693
        %v715 = vunpack.c.l.b16 %v694
        %v716 = vunpack.c.h.b16 %v694
        %v717 = vunpack.c.l.b16 %v695
        %v718 = vunpack.c.h.b16 %v695
        %v719 = vunpack.c.l.b16 %v696
        %v720 = vunpack.c.h.b16 %v696
        %v721 = vpack.c.b16 %v705, %v705
        %v722 = vpack.c.b16 %v706, %v706
        %v723 = vpack.c.b16 %v707, %v707
        %v724 = vpack.c.b16 %v708, %v708
        %v725 = vpack.c.b16 %v709, %v709
        %v726 = vpack.c.b16 %v710, %v710
        %v727 = vpack.c.b16 %v711, %v711
        %v728 = vpack.c.b16 %v712, %v712
        %v729 = vpack.c.b16 %v713, %v713
        %v730 = vpack.c.b16 %v714, %v714
        %v731 = vpack.c.b16 %v715, %v715
        %v732 = vpack.c.b16 %v716, %v716
        %v733 = vpack.c.b16 %v717, %v717
        %v734 = vpack.c.b16 %v718, %v718
        %v735 = vpack.c.b16 %v719, %v719
        %v736 = vpack.c.b16 %v720, %v720
        %753 = vst [vmem:[%s278] sm:$0xf] %v721
        %754 = vst [vmem:[%s278 + $0x4] sm:$0xf] %v722
        %755 = vst [vmem:[%s278 + $0x8] sm:$0xf] %v723
        %756 = vst [vmem:[%s278 + $0xc] sm:$0xf] %v724
        %757 = vst [vmem:[%s278 + $0x10] sm:$0xf] %v725
        %758 = vst [vmem:[%s278 + $0x14] sm:$0xf] %v726
        %759 = vst [vmem:[%s278 + $0x18] sm:$0xf] %v727
        %760 = vst [vmem:[%s278 + $0x1c] sm:$0xf] %v728
        %761 = vst [vmem:[%s278 + $0x20] sm:$0xf] %v729
        %762 = vst [vmem:[%s278 + $0x24] sm:$0xf] %v730
        %763 = vst [vmem:[%s278 + $0x28] sm:$0xf] %v731
        %764 = vst [vmem:[%s278 + $0x2c] sm:$0xf] %v732
        %765 = vst [vmem:[%s278 + $0x30] sm:$0xf] %v733
        %766 = vst [vmem:[%s278 + $0x34] sm:$0xf] %v734
        %767 = vst [vmem:[%s278 + $0x38] sm:$0xf] %v735
        %768 = vst [vmem:[%s278 + $0x3c] sm:$0xf] %v736
        %v769 = vld [vmem:[#allocation2] sm:$0xff]
        %v770 = vld [vmem:[#allocation2 + $0x8] sm:$0xff]
        %v771 = vld [vmem:[#allocation2 + $0x10] sm:$0xff]
        %v772 = vld [vmem:[#allocation2 + $0x18] sm:$0xff]
        %v773 = vld [vmem:[#allocation2 + $0x20] sm:$0xff]
        %v774 = vld [vmem:[#allocation2 + $0x28] sm:$0xff]
        %v775 = vld [vmem:[#allocation2 + $0x30] sm:$0xff]
        %v776 = vld [vmem:[#allocation2 + $0x38] sm:$0xff]
        %v777 = vld [vmem:[#allocation2 + $0x40] sm:$0xff]
        %v778 = vld [vmem:[#allocation2 + $0x48] sm:$0xff]
        %v779 = vld [vmem:[#allocation2 + $0x50] sm:$0xff]
        %v780 = vld [vmem:[#allocation2 + $0x58] sm:$0xff]
        %v781 = vld [vmem:[#allocation2 + $0x60] sm:$0xff]
        %v782 = vld [vmem:[#allocation2 + $0x68] sm:$0xff]
        %v783 = vld [vmem:[#allocation2 + $0x70] sm:$0xff]
        %v784 = vld [vmem:[#allocation2 + $0x78] sm:$0xff]
        %785 = vmax.xlane.f32.xlu0 %v627
        %v786 = vpop.xlane.xlu0 %785
        %787 = vmax.xlane.f32.xlu0 %v630
        %v788 = vpop.xlane.xlu0 %787
        %789 = vmax.xlane.f32.xlu0 %v635
        %v790 = vpop.xlane.xlu0 %789
        %791 = vmax.xlane.f32.xlu0 %v638
        %v792 = vpop.xlane.xlu0 %791
        %793 = vmax.xlane.f32.xlu0 %v643
        %v794 = vpop.xlane.xlu0 %793
        %795 = vmax.xlane.f32.xlu0 %v646
        %v796 = vpop.xlane.xlu0 %795
        %797 = vmax.xlane.f32.xlu0 %v651
        %v798 = vpop.xlane.xlu0 %797
        %799 = vmax.xlane.f32.xlu0 %v654
        %v800 = vpop.xlane.xlu0 %799
        %801 = vmax.xlane.f32.xlu0 %v659
        %v802 = vpop.xlane.xlu0 %801
        %803 = vmax.xlane.f32.xlu0 %v662
        %v804 = vpop.xlane.xlu0 %803
        %805 = vmax.xlane.f32.xlu0 %v667
        %v806 = vpop.xlane.xlu0 %805
        %807 = vmax.xlane.f32.xlu0 %v670
        %v808 = vpop.xlane.xlu0 %807
        %809 = vmax.xlane.f32.xlu0 %v675
        %v810 = vpop.xlane.xlu0 %809
        %811 = vmax.xlane.f32.xlu0 %v678
        %v812 = vpop.xlane.xlu0 %811
        %813 = vmax.xlane.f32.xlu0 %v683
        %v814 = vpop.xlane.xlu0 %813
        %815 = vmax.xlane.f32.xlu0 %v686
        %v816 = vpop.xlane.xlu0 %815
        %v817 = vmax.f32 %v769, %v786
        %v818 = vmax.f32 %v770, %v788
        %v819 = vmax.f32 %v771, %v790
        %v820 = vmax.f32 %v772, %v792
        %v821 = vmax.f32 %v773, %v794
        %v822 = vmax.f32 %v774, %v796
        %v823 = vmax.f32 %v775, %v798
        %v824 = vmax.f32 %v776, %v800
        %v825 = vmax.f32 %v777, %v802
        %v826 = vmax.f32 %v778, %v804
        %v827 = vmax.f32 %v779, %v806
        %v828 = vmax.f32 %v780, %v808
        %v829 = vmax.f32 %v781, %v810
        %v830 = vmax.f32 %v782, %v812
        %v831 = vmax.f32 %v783, %v814
        %v832 = vmax.f32 %v784, %v816
        %v833 = vld [vmem:[#allocation3] sm:$0xff]
        %v834 = vld [vmem:[#allocation3 + $0x8] sm:$0xff]
        %v835 = vld [vmem:[#allocation3 + $0x10] sm:$0xff]
        %v836 = vld [vmem:[#allocation3 + $0x18] sm:$0xff]
        %v837 = vld [vmem:[#allocation3 + $0x20] sm:$0xff]
        %v838 = vld [vmem:[#allocation3 + $0x28] sm:$0xff]
        %v839 = vld [vmem:[#allocation3 + $0x30] sm:$0xff]
        %v840 = vld [vmem:[#allocation3 + $0x38] sm:$0xff]
        %v841 = vld [vmem:[#allocation3 + $0x40] sm:$0xff]
        %v842 = vld [vmem:[#allocation3 + $0x48] sm:$0xff]
        %v843 = vld [vmem:[#allocation3 + $0x50] sm:$0xff]
        %v844 = vld [vmem:[#allocation3 + $0x58] sm:$0xff]
        %v845 = vld [vmem:[#allocation3 + $0x60] sm:$0xff]
        %v846 = vld [vmem:[#allocation3 + $0x68] sm:$0xff]
        %v847 = vld [vmem:[#allocation3 + $0x70] sm:$0xff]
        %v848 = vld [vmem:[#allocation3 + $0x78] sm:$0xff]
        %v849 = vsub.f32 %v769, %v817
        %v850 = vsub.f32 %v770, %v818
        %v851 = vsub.f32 %v771, %v819
        %v852 = vsub.f32 %v772, %v820
        %v853 = vsub.f32 %v773, %v821
        %v854 = vsub.f32 %v774, %v822
        %v855 = vsub.f32 %v775, %v823
        %v856 = vsub.f32 %v776, %v824
        %v857 = vsub.f32 %v777, %v825
        %v858 = vsub.f32 %v778, %v826
        %v859 = vsub.f32 %v779, %v827
        %v860 = vsub.f32 %v780, %v828
        %v861 = vsub.f32 %v781, %v829
        %v862 = vsub.f32 %v782, %v830
        %v863 = vsub.f32 %v783, %v831
        %v864 = vsub.f32 %v784, %v832
        %v865 = vmul.f32 %v849, 10.0
        %v866 = vmul.f32 %v850, 10.0
        %v867 = vmul.f32 %v851, 10.0
        %v868 = vmul.f32 %v852, 10.0
        %v869 = vmul.f32 %v853, 10.0
        %v870 = vmul.f32 %v854, 10.0
        %v871 = vmul.f32 %v855, 10.0
        %v872 = vmul.f32 %v856, 10.0
        %v873 = vmul.f32 %v857, 10.0
        %v874 = vmul.f32 %v858, 10.0
        %v875 = vmul.f32 %v859, 10.0
        %v876 = vmul.f32 %v860, 10.0
        %v877 = vmul.f32 %v861, 10.0
        %v878 = vmul.f32 %v862, 10.0
        %v879 = vmul.f32 %v863, 10.0
        %v880 = vmul.f32 %v864, 10.0
        %v881 = vmul.f32 %v865, 1.442695
        %v882 = vpow.pop %v881
        %v883 = vmul.f32 %v866, 1.442695
        %v884 = vpow.pop %v883
        %v885 = vmul.f32 %v867, 1.442695
        %v886 = vpow.pop %v885
        %v887 = vmul.f32 %v868, 1.442695
        %v888 = vpow.pop %v887
        %v889 = vmul.f32 %v869, 1.442695
        %v890 = vpow.pop %v889
        %v891 = vmul.f32 %v870, 1.442695
        %v892 = vpow.pop %v891
        %v893 = vmul.f32 %v871, 1.442695
        %v894 = vpow.pop %v893
        %v895 = vmul.f32 %v872, 1.442695
        %v896 = vpow.pop %v895
        %v897 = vmul.f32 %v873, 1.442695
        %v898 = vpow.pop %v897
        %v899 = vmul.f32 %v874, 1.442695
        %v900 = vpow.pop %v899
        %v901 = vmul.f32 %v875, 1.442695
        %v902 = vpow.pop %v901
        %v903 = vmul.f32 %v876, 1.442695
        %v904 = vpow.pop %v903
        %v905 = vmul.f32 %v877, 1.442695
        %v906 = vpow.pop %v905
        %v907 = vmul.f32 %v878, 1.442695
        %v908 = vpow.pop %v907
        %v909 = vmul.f32 %v879, 1.442695
        %v910 = vpow.pop %v909
        %v911 = vmul.f32 %v880, 1.442695
        %v912 = vpow.pop %v911
        %v913 = vmul.f32 %v833, %v882
        %v914 = vmul.f32 %v834, %v884
        %v915 = vmul.f32 %v835, %v886
        %v916 = vmul.f32 %v836, %v888
        %v917 = vmul.f32 %v837, %v890
        %v918 = vmul.f32 %v838, %v892
        %v919 = vmul.f32 %v839, %v894
        %v920 = vmul.f32 %v840, %v896
        %v921 = vmul.f32 %v841, %v898
        %v922 = vmul.f32 %v842, %v900
        %v923 = vmul.f32 %v843, %v902
        %v924 = vmul.f32 %v844, %v904
        %v925 = vmul.f32 %v845, %v906
        %v926 = vmul.f32 %v846, %v908
        %v927 = vmul.f32 %v847, %v910
        %v928 = vmul.f32 %v848, %v912
        %930 = vset.pattern.permute.xlu0 0
        %931 = vperm.xlu0 %930, %v817
        %v932 = vpop.permute.xlu0 %931
        %935 = vset.pattern.permute.xlu0 0
        %936 = vperm.xlu0 %935, %v818
        %v937 = vpop.permute.xlu0 %936
        %940 = vset.pattern.permute.xlu0 0
        %941 = vperm.xlu0 %940, %v819
        %v942 = vpop.permute.xlu0 %941
        %945 = vset.pattern.permute.xlu0 0
        %946 = vperm.xlu0 %945, %v820
        %v947 = vpop.permute.xlu0 %946
        %950 = vset.pattern.permute.xlu0 0
        %951 = vperm.xlu0 %950, %v821
        %v952 = vpop.permute.xlu0 %951
        %955 = vset.pattern.permute.xlu0 0
        %956 = vperm.xlu0 %955, %v822
        %v957 = vpop.permute.xlu0 %956
        %960 = vset.pattern.permute.xlu0 0
        %961 = vperm.xlu0 %960, %v823
        %v962 = vpop.permute.xlu0 %961
        %965 = vset.pattern.permute.xlu0 0
        %966 = vperm.xlu0 %965, %v824
        %v967 = vpop.permute.xlu0 %966
        %970 = vset.pattern.permute.xlu0 0
        %971 = vperm.xlu0 %970, %v825
        %v972 = vpop.permute.xlu0 %971
        %975 = vset.pattern.permute.xlu0 0
        %976 = vperm.xlu0 %975, %v826
        %v977 = vpop.permute.xlu0 %976
        %980 = vset.pattern.permute.xlu0 0
        %981 = vperm.xlu0 %980, %v827
        %v982 = vpop.permute.xlu0 %981
        %985 = vset.pattern.permute.xlu0 0
        %986 = vperm.xlu0 %985, %v828
        %v987 = vpop.permute.xlu0 %986
        %990 = vset.pattern.permute.xlu0 0
        %991 = vperm.xlu0 %990, %v829
        %v992 = vpop.permute.xlu0 %991
        %995 = vset.pattern.permute.xlu0 0
        %996 = vperm.xlu0 %995, %v830
        %v997 = vpop.permute.xlu0 %996
        %1000 = vset.pattern.permute.xlu0 0
        %1001 = vperm.xlu0 %1000, %v831
        %v1002 = vpop.permute.xlu0 %1001
        %1005 = vset.pattern.permute.xlu0 0
        %1006 = vperm.xlu0 %1005, %v832
        %v1007 = vpop.permute.xlu0 %1006
        %v1009 = vsub.f32 %v627, %v932
        %v1010 = vsub.f32 %v630, %v937
        %v1011 = vsub.f32 %v635, %v942
        %v1012 = vsub.f32 %v638, %v947
        %v1013 = vsub.f32 %v643, %v952
        %v1014 = vsub.f32 %v646, %v957
        %v1015 = vsub.f32 %v651, %v962
        %v1016 = vsub.f32 %v654, %v967
        %v1017 = vsub.f32 %v659, %v972
        %v1018 = vsub.f32 %v662, %v977
        %v1019 = vsub.f32 %v667, %v982
        %v1020 = vsub.f32 %v670, %v987
        %v1021 = vsub.f32 %v675, %v992
        %v1022 = vsub.f32 %v678, %v997
        %v1023 = vsub.f32 %v683, %v1002
        %v1024 = vsub.f32 %v686, %v1007
        %v1025 = vmul.f32 %v1009, 10.0
        %v1026 = vmul.f32 %v1010, 10.0
        %v1027 = vmul.f32 %v1011, 10.0
        %v1028 = vmul.f32 %v1012, 10.0
        %v1029 = vmul.f32 %v1013, 10.0
        %v1030 = vmul.f32 %v1014, 10.0
        %v1031 = vmul.f32 %v1015, 10.0
        %v1032 = vmul.f32 %v1016, 10.0
        %v1033 = vmul.f32 %v1017, 10.0
        %v1034 = vmul.f32 %v1018, 10.0
        %v1035 = vmul.f32 %v1019, 10.0
        %v1036 = vmul.f32 %v1020, 10.0
        %v1037 = vmul.f32 %v1021, 10.0
        %v1038 = vmul.f32 %v1022, 10.0
        %v1039 = vmul.f32 %v1023, 10.0
        %v1040 = vmul.f32 %v1024, 10.0
        %v1041 = vmul.f32 %v1025, 1.442695
        %v1042 = vpow.pop %v1041
        %v1043 = vmul.f32 %v1026, 1.442695
        %v1044 = vpow.pop %v1043
        %v1045 = vmul.f32 %v1027, 1.442695
        %v1046 = vpow.pop %v1045
        %v1047 = vmul.f32 %v1028, 1.442695
        %v1048 = vpow.pop %v1047
        %v1049 = vmul.f32 %v1029, 1.442695
        %v1050 = vpow.pop %v1049
        %v1051 = vmul.f32 %v1030, 1.442695
        %v1052 = vpow.pop %v1051
        %v1053 = vmul.f32 %v1031, 1.442695
        %v1054 = vpow.pop %v1053
        %v1055 = vmul.f32 %v1032, 1.442695
        %v1056 = vpow.pop %v1055
        %v1057 = vmul.f32 %v1033, 1.442695
        %v1058 = vpow.pop %v1057
        %v1059 = vmul.f32 %v1034, 1.442695
        %v1060 = vpow.pop %v1059
        %v1061 = vmul.f32 %v1035, 1.442695
        %v1062 = vpow.pop %v1061
        %v1063 = vmul.f32 %v1036, 1.442695
        %v1064 = vpow.pop %v1063
        %v1065 = vmul.f32 %v1037, 1.442695
        %v1066 = vpow.pop %v1065
        %v1067 = vmul.f32 %v1038, 1.442695
        %v1068 = vpow.pop %v1067
        %v1069 = vmul.f32 %v1039, 1.442695
        %v1070 = vpow.pop %v1069
        %v1071 = vmul.f32 %v1040, 1.442695
        %v1072 = vpow.pop %v1071
        %1073 = vadd.xlane.f32.xlu0 %v1042
        %v1074 = vpop.xlane.xlu0 %1073
        %1075 = vadd.xlane.f32.xlu0 %v1044
        %v1076 = vpop.xlane.xlu0 %1075
        %1077 = vadd.xlane.f32.xlu0 %v1046
        %v1078 = vpop.xlane.xlu0 %1077
        %1079 = vadd.xlane.f32.xlu0 %v1048
        %v1080 = vpop.xlane.xlu0 %1079
        %1081 = vadd.xlane.f32.xlu0 %v1050
        %v1082 = vpop.xlane.xlu0 %1081
        %1083 = vadd.xlane.f32.xlu0 %v1052
        %v1084 = vpop.xlane.xlu0 %1083
        %1085 = vadd.xlane.f32.xlu0 %v1054
        %v1086 = vpop.xlane.xlu0 %1085
        %1087 = vadd.xlane.f32.xlu0 %v1056
        %v1088 = vpop.xlane.xlu0 %1087
        %1089 = vadd.xlane.f32.xlu0 %v1058
        %v1090 = vpop.xlane.xlu0 %1089
        %1091 = vadd.xlane.f32.xlu0 %v1060
        %v1092 = vpop.xlane.xlu0 %1091
        %1093 = vadd.xlane.f32.xlu0 %v1062
        %v1094 = vpop.xlane.xlu0 %1093
        %1095 = vadd.xlane.f32.xlu0 %v1064
        %v1096 = vpop.xlane.xlu0 %1095
        %1097 = vadd.xlane.f32.xlu0 %v1066
        %v1098 = vpop.xlane.xlu0 %1097
        %1099 = vadd.xlane.f32.xlu0 %v1068
        %v1100 = vpop.xlane.xlu0 %1099
        %1101 = vadd.xlane.f32.xlu0 %v1070
        %v1102 = vpop.xlane.xlu0 %1101
        %1103 = vadd.xlane.f32.xlu0 %v1072
        %v1104 = vpop.xlane.xlu0 %1103
        %v1105 = vadd.f32 %v913, %v1074
        %v1106 = vadd.f32 %v914, %v1076
        %v1107 = vadd.f32 %v915, %v1078
        %v1108 = vadd.f32 %v916, %v1080
        %v1109 = vadd.f32 %v917, %v1082
        %v1110 = vadd.f32 %v918, %v1084
        %v1111 = vadd.f32 %v919, %v1086
        %v1112 = vadd.f32 %v920, %v1088
        %v1113 = vadd.f32 %v921, %v1090
        %v1114 = vadd.f32 %v922, %v1092
        %v1115 = vadd.f32 %v923, %v1094
        %v1116 = vadd.f32 %v924, %v1096
        %v1117 = vadd.f32 %v925, %v1098
        %v1118 = vadd.f32 %v926, %v1100
        %v1119 = vadd.f32 %v927, %v1102
        %v1120 = vadd.f32 %v928, %v1104
        %vm1121 = vcmask 7168
        %1122 = vst.msk [vmem:[#allocation3] sm:$0xff] %vm1121, %v1105
        %1123 = vst.msk [vmem:[#allocation3 + $0x8] sm:$0xff] %vm1121, %v1106
        %1124 = vst.msk [vmem:[#allocation3 + $0x10] sm:$0xff] %vm1121, %v1107
        %1125 = vst.msk [vmem:[#allocation3 + $0x18] sm:$0xff] %vm1121, %v1108
        %1126 = vst.msk [vmem:[#allocation3 + $0x20] sm:$0xff] %vm1121, %v1109
        %1127 = vst.msk [vmem:[#allocation3 + $0x28] sm:$0xff] %vm1121, %v1110
        %1128 = vst.msk [vmem:[#allocation3 + $0x30] sm:$0xff] %vm1121, %v1111
        %1129 = vst.msk [vmem:[#allocation3 + $0x38] sm:$0xff] %vm1121, %v1112
        %1130 = vst.msk [vmem:[#allocation3 + $0x40] sm:$0xff] %vm1121, %v1113
        %1131 = vst.msk [vmem:[#allocation3 + $0x48] sm:$0xff] %vm1121, %v1114
        %1132 = vst.msk [vmem:[#allocation3 + $0x50] sm:$0xff] %vm1121, %v1115
        %1133 = vst.msk [vmem:[#allocation3 + $0x58] sm:$0xff] %vm1121, %v1116
        %1134 = vst.msk [vmem:[#allocation3 + $0x60] sm:$0xff] %vm1121, %v1117
        %1135 = vst.msk [vmem:[#allocation3 + $0x68] sm:$0xff] %vm1121, %v1118
        %1136 = vst.msk [vmem:[#allocation3 + $0x70] sm:$0xff] %vm1121, %v1119
        %1137 = vst.msk [vmem:[#allocation3 + $0x78] sm:$0xff] %vm1121, %v1120
        %1138 = vst.msk [vmem:[#allocation2] sm:$0xff] %vm1121, %v817
        %1139 = vst.msk [vmem:[#allocation2 + $0x8] sm:$0xff] %vm1121, %v818
        %1140 = vst.msk [vmem:[#allocation2 + $0x10] sm:$0xff] %vm1121, %v819
        %1141 = vst.msk [vmem:[#allocation2 + $0x18] sm:$0xff] %vm1121, %v820
        %1142 = vst.msk [vmem:[#allocation2 + $0x20] sm:$0xff] %vm1121, %v821
        %1143 = vst.msk [vmem:[#allocation2 + $0x28] sm:$0xff] %vm1121, %v822
        %1144 = vst.msk [vmem:[#allocation2 + $0x30] sm:$0xff] %vm1121, %v823
        %1145 = vst.msk [vmem:[#allocation2 + $0x38] sm:$0xff] %vm1121, %v824
        %1146 = vst.msk [vmem:[#allocation2 + $0x40] sm:$0xff] %vm1121, %v825
        %1147 = vst.msk [vmem:[#allocation2 + $0x48] sm:$0xff] %vm1121, %v826
        %1148 = vst.msk [vmem:[#allocation2 + $0x50] sm:$0xff] %vm1121, %v827
        %1149 = vst.msk [vmem:[#allocation2 + $0x58] sm:$0xff] %vm1121, %v828
        %1150 = vst.msk [vmem:[#allocation2 + $0x60] sm:$0xff] %vm1121, %v829
        %1151 = vst.msk [vmem:[#allocation2 + $0x68] sm:$0xff] %vm1121, %v830
        %1152 = vst.msk [vmem:[#allocation2 + $0x70] sm:$0xff] %vm1121, %v831
        %1153 = vst.msk [vmem:[#allocation2 + $0x78] sm:$0xff] %vm1121, %v832
        %p1154 = scmp.eq.s32.totalorder %s29, 1
        // Predicated region
        $region41: #{tpu_custom_call.1} parent=31 // pred_check
          %p1155 = pneg %p1154
        $region42: #{tpu_custom_call.1} parent=31 // pred_check_branch
          %1157 = sbr.rel (%p1155) target = $region44
        $region43: #{tpu_custom_call.1} parent=31 // pred_region
          %v1158 = vld [vmem:[#allocation2] sm:$0xff]
          %v1159 = vld [vmem:[#allocation2 + $0x8] sm:$0xff]
          %v1160 = vld [vmem:[#allocation2 + $0x10] sm:$0xff]
          %v1161 = vld [vmem:[#allocation2 + $0x18] sm:$0xff]
          %v1162 = vld [vmem:[#allocation2 + $0x20] sm:$0xff]
          %v1163 = vld [vmem:[#allocation2 + $0x28] sm:$0xff]
          %v1164 = vld [vmem:[#allocation2 + $0x30] sm:$0xff]
          %v1165 = vld [vmem:[#allocation2 + $0x38] sm:$0xff]
          %v1166 = vld [vmem:[#allocation2 + $0x40] sm:$0xff]
          %v1167 = vld [vmem:[#allocation2 + $0x48] sm:$0xff]
          %v1168 = vld [vmem:[#allocation2 + $0x50] sm:$0xff]
          %v1169 = vld [vmem:[#allocation2 + $0x58] sm:$0xff]
          %v1170 = vld [vmem:[#allocation2 + $0x60] sm:$0xff]
          %v1171 = vld [vmem:[#allocation2 + $0x68] sm:$0xff]
          %v1172 = vld [vmem:[#allocation2 + $0x70] sm:$0xff]
          %v1173 = vld [vmem:[#allocation2 + $0x78] sm:$0xff]
          %v1174 = vld [vmem:[#allocation3] sm:$0xff]
          %v1175 = vld [vmem:[#allocation3 + $0x8] sm:$0xff]
          %v1176 = vld [vmem:[#allocation3 + $0x10] sm:$0xff]
          %v1177 = vld [vmem:[#allocation3 + $0x18] sm:$0xff]
          %v1178 = vld [vmem:[#allocation3 + $0x20] sm:$0xff]
          %v1179 = vld [vmem:[#allocation3 + $0x28] sm:$0xff]
          %v1180 = vld [vmem:[#allocation3 + $0x30] sm:$0xff]
          %v1181 = vld [vmem:[#allocation3 + $0x38] sm:$0xff]
          %v1182 = vld [vmem:[#allocation3 + $0x40] sm:$0xff]
          %v1183 = vld [vmem:[#allocation3 + $0x48] sm:$0xff]
          %v1184 = vld [vmem:[#allocation3 + $0x50] sm:$0xff]
          %v1185 = vld [vmem:[#allocation3 + $0x58] sm:$0xff]
          %v1186 = vld [vmem:[#allocation3 + $0x60] sm:$0xff]
          %v1187 = vld [vmem:[#allocation3 + $0x68] sm:$0xff]
          %v1188 = vld [vmem:[#allocation3 + $0x70] sm:$0xff]
          %v1189 = vld [vmem:[#allocation3 + $0x78] sm:$0xff]
          %v1190 = vlog2.pop %v1174
          %v1191 = vmul.f32 %v1190, 0.6931472
          %v1192 = vlog2.pop %v1175
          %v1193 = vmul.f32 %v1192, 0.6931472
          %v1194 = vlog2.pop %v1176
          %v1195 = vmul.f32 %v1194, 0.6931472
          %v1196 = vlog2.pop %v1177
          %v1197 = vmul.f32 %v1196, 0.6931472
          %v1198 = vlog2.pop %v1178
          %v1199 = vmul.f32 %v1198, 0.6931472
          %v1200 = vlog2.pop %v1179
          %v1201 = vmul.f32 %v1200, 0.6931472
          %v1202 = vlog2.pop %v1180
          %v1203 = vmul.f32 %v1202, 0.6931472
          %v1204 = vlog2.pop %v1181
          %v1205 = vmul.f32 %v1204, 0.6931472
          %v1206 = vlog2.pop %v1182
          %v1207 = vmul.f32 %v1206, 0.6931472
          %v1208 = vlog2.pop %v1183
          %v1209 = vmul.f32 %v1208, 0.6931472
          %v1210 = vlog2.pop %v1184
          %v1211 = vmul.f32 %v1210, 0.6931472
          %v1212 = vlog2.pop %v1185
          %v1213 = vmul.f32 %v1212, 0.6931472
          %v1214 = vlog2.pop %v1186
          %v1215 = vmul.f32 %v1214, 0.6931472
          %v1216 = vlog2.pop %v1187
          %v1217 = vmul.f32 %v1216, 0.6931472
          %v1218 = vlog2.pop %v1188
          %v1219 = vmul.f32 %v1218, 0.6931472
          %v1220 = vlog2.pop %v1189
          %v1221 = vmul.f32 %v1220, 0.6931472
          %v1222 = vsub.f32 %v1191, 5.5451775
          %v1223 = vsub.f32 %v1193, 5.5451775
          %v1224 = vsub.f32 %v1195, 5.5451775
          %v1225 = vsub.f32 %v1197, 5.5451775
          %v1226 = vsub.f32 %v1199, 5.5451775
          %v1227 = vsub.f32 %v1201, 5.5451775
          %v1228 = vsub.f32 %v1203, 5.5451775
          %v1229 = vsub.f32 %v1205, 5.5451775
          %v1230 = vsub.f32 %v1207, 5.5451775
          %v1231 = vsub.f32 %v1209, 5.5451775
          %v1232 = vsub.f32 %v1211, 5.5451775
          %v1233 = vsub.f32 %v1213, 5.5451775
          %v1234 = vsub.f32 %v1215, 5.5451775
          %v1235 = vsub.f32 %v1217, 5.5451775
          %v1236 = vsub.f32 %v1219, 5.5451775
          %v1237 = vsub.f32 %v1221, 5.5451775
          %v1238 = vmul.f32 %v1222, 0.1
          %v1239 = vmul.f32 %v1223, 0.1
          %v1240 = vmul.f32 %v1224, 0.1
          %v1241 = vmul.f32 %v1225, 0.1
          %v1242 = vmul.f32 %v1226, 0.1
          %v1243 = vmul.f32 %v1227, 0.1
          %v1244 = vmul.f32 %v1228, 0.1
          %v1245 = vmul.f32 %v1229, 0.1
          %v1246 = vmul.f32 %v1230, 0.1
          %v1247 = vmul.f32 %v1231, 0.1
          %v1248 = vmul.f32 %v1232, 0.1
          %v1249 = vmul.f32 %v1233, 0.1
          %v1250 = vmul.f32 %v1234, 0.1
          %v1251 = vmul.f32 %v1235, 0.1
          %v1252 = vmul.f32 %v1236, 0.1
          %v1253 = vmul.f32 %v1237, 0.1
          %v1254 = vadd.f32 %v1158, %v1238
          %v1255 = vadd.f32 %v1159, %v1239
          %v1256 = vadd.f32 %v1160, %v1240
          %v1257 = vadd.f32 %v1161, %v1241
          %v1258 = vadd.f32 %v1162, %v1242
          %v1259 = vadd.f32 %v1163, %v1243
          %v1260 = vadd.f32 %v1164, %v1244
          %v1261 = vadd.f32 %v1165, %v1245
          %v1262 = vadd.f32 %v1166, %v1246
          %v1263 = vadd.f32 %v1167, %v1247
          %v1264 = vadd.f32 %v1168, %v1248
          %v1265 = vadd.f32 %v1169, %v1249
          %v1266 = vadd.f32 %v1170, %v1250
          %v1267 = vadd.f32 %v1171, %v1251
          %v1268 = vadd.f32 %v1172, %v1252
          %v1269 = vadd.f32 %v1173, %v1253
          %1270 = vst.msk [vmem:[%s312] sm:$0xff] %vm1121, %v1254
          %1271 = vst.msk [vmem:[%s312 + $0x8] sm:$0xff] %vm1121, %v1255
          %1272 = vst.msk [vmem:[%s312 + $0x10] sm:$0xff] %vm1121, %v1256
          %1273 = vst.msk [vmem:[%s312 + $0x18] sm:$0xff] %vm1121, %v1257
          %1274 = vst.msk [vmem:[%s312 + $0x20] sm:$0xff] %vm1121, %v1258
          %1275 = vst.msk [vmem:[%s312 + $0x28] sm:$0xff] %vm1121, %v1259
          %1276 = vst.msk [vmem:[%s312 + $0x30] sm:$0xff] %vm1121, %v1260
          %1277 = vst.msk [vmem:[%s312 + $0x38] sm:$0xff] %vm1121, %v1261
          %1278 = vst.msk [vmem:[%s312 + $0x40] sm:$0xff] %vm1121, %v1262
          %1279 = vst.msk [vmem:[%s312 + $0x48] sm:$0xff] %vm1121, %v1263
          %1280 = vst.msk [vmem:[%s312 + $0x50] sm:$0xff] %vm1121, %v1264
          %1281 = vst.msk [vmem:[%s312 + $0x58] sm:$0xff] %vm1121, %v1265
          %1282 = vst.msk [vmem:[%s312 + $0x60] sm:$0xff] %vm1121, %v1266
          %1283 = vst.msk [vmem:[%s312 + $0x68] sm:$0xff] %vm1121, %v1267
          %1284 = vst.msk [vmem:[%s312 + $0x70] sm:$0xff] %vm1121, %v1268
          %1285 = vst.msk [vmem:[%s312 + $0x78] sm:$0xff] %vm1121, %v1269
        $region44: #{tpu_custom_call.1} parent=31 // pred_fallthru
          _
        %s1286 = sand.u32 %s133, 1
        %s1287 = scalar_lea.sflag [#allocation6], %s1286
        %s1288 = sand.u32 %s133, 1
        %s1289 = smul.addr %s1288, 64
        %s1290 = scalar_lea.vmem [#allocation7], %s1289
        %s1291 = smul.u32 16, %s27
        %p1292 = scmp.lt.s32.totalorder %s28, 1
        %s1293 = scalar_select %p1292, %s28, 1
        %p1294 = scmp.lt.s32.totalorder %s1291, 31
        %s1295 = scalar_select %p1294, %s1291, 31
        %s1296 = smul.addr %s1293, 32
        %s1297 = sadd.s32 %s1295, %s1296
        %s1298 = smul.addr %s1297, 8
        %s1299 = scalar_lea.vmem %s4, %s1298
        // Predicated region
        $region45: #{tpu_custom_call.1} parent=31 // pred_check
          %p1300 = pneg %p143
        $region46: #{tpu_custom_call.1} parent=31 // pred_check_branch
          %1302 = sbr.rel (%p1300) target = $region48
        $region47: #{tpu_custom_call.1} parent=31 // pred_region
          %s1303 = smul.u32 16, %s27
          %s1305 = ssub.s32 1024, 1024
          %1306 = vsyncadd %s1287, %s1305
          %s1307 = smul.addr %s1303, 2
          %s1308 = sadd.s32 %s29, %s1307
          %s1309 = smul.addr %s28, 64
          %s1310 = sadd.s32 %s1308, %s1309
          %s1311 = smul.addr %s1310, 64
          %s1312 = scalar_lea.hbm %s3, %s1311
          %s1313 = sshll.u32 %s1290, 4
          %s1314 = int_to_ptr.vmem [resolvable:$true] %s1313
          %1319 = dma.vmem_to_hbm [thread:$0]  %s1314, 1024, %s1312, %s1287, 64, 128, 4
        $region48: #{tpu_custom_call.1} parent=31 // pred_fallthru
          _
        // Predicated region
        $region49: #{tpu_custom_call.1} parent=31 // pred_check
          %p1320 = pneg %p171
        $region50: #{tpu_custom_call.1} parent=31 // pred_check_branch
          %1322 = sbr.rel (%p1320) target = $region52
        $region51: #{tpu_custom_call.1} parent=31 // pred_region
          %s1323 = smul.u32 16, %s27
        $region52: #{tpu_custom_call.1} parent=31 // pred_fallthru
          _
      $region32: #{tpu_custom_call.1} parent=5 // pred_fallthru
        _
      %p1324 = scmp.le.s32.totalorder 2, %s17
      // Predicated region
      $region53: #{tpu_custom_call.1} parent=5 // pred_check
        %p1325 = pneg %p1324
      $region54: #{tpu_custom_call.1} parent=5 // pred_check_branch
        %1327 = sbr.rel (%p1325) target = $region56
      $region55: #{tpu_custom_call.1} parent=5 // pred_region
        %s1328 = ssub.s32 %s17, 2
        // Predicated region
        $region57: #{tpu_custom_call.1} parent=55 // pred_check
          %p1329 = pneg %p149
        $region58: #{tpu_custom_call.1} parent=55 // pred_check_branch
          %1331 = sbr.rel (%p1329) target = $region60
        $region59: #{tpu_custom_call.1} parent=55 // pred_region
          %s1332 = sand.u32 %s134, 1
          %s1333 = scalar_lea.sflag [#allocation6], %s1332
          %s1334 = sand.u32 %s134, 1
          %s1335 = smul.addr %s1334, 64
          %s1336 = scalar_lea.vmem [#allocation7], %s1335
          %1337 = dma.done %s1333, 1024
        $region60: #{tpu_custom_call.1} parent=55 // pred_fallthru
          _
        // Predicated region
        $region61: #{tpu_custom_call.1} parent=55 // pred_check
          %p1338 = pneg %p177
        $region62: #{tpu_custom_call.1} parent=55 // pred_check_branch
          %1340 = sbr.rel (%p1338) target = $region64
        $region63: #{tpu_custom_call.1} parent=55 // pred_region
          %s1341 = smul.u32 16, %s30
          %p1342 = scmp.lt.s32.totalorder %s31, 1
          %s1343 = scalar_select %p1342, %s31, 1
          %p1344 = scmp.lt.s32.totalorder %s1341, 31
          %s1345 = scalar_select %p1344, %s1341, 31
          %s1346 = smul.addr %s1343, 32
          %s1347 = sadd.s32 %s1345, %s1346
          %s1348 = smul.addr %s1347, 8
          %s1349 = scalar_lea.vmem %s4, %s1348
        $region64: #{tpu_custom_call.1} parent=55 // pred_fallthru
          _
      $region56: #{tpu_custom_call.1} parent=5 // pred_fallthru
        _
    $region6: #{tpu_custom_call.1} parent=1 // loop_footer
      %s21 = sadd.s32 1, %s17
    $region7: #{tpu_custom_call.1} parent=1 // loop_footer_branch
      %16 = sbr.rel target = $region3
    $region8: #{tpu_custom_call.1} parent=1 // loop_exit
      _
    %1350 = vsyncpa [#allocation5], 1
    %s1351 = scalar_lea.sflag [#allocation5], 1
    %1352 = vsyncpa %s1351, 1
    %1353 = vsyncpa [#allocation6], 1
    %s1354 = scalar_lea.sflag [#allocation6], 1
    %1355 = vsyncpa %s1354, 1

</llo_original>
